<compile_context>
chip_gen: v7x
topology: tpu7x:2x2x1
jax: 0.10.0
libtpu: 0.0.40
codegen_flags: <defaults>
</compile_context>

<pallas_src>
import functools

import jax
import jax.numpy as jnp
from jax import lax
from jax.experimental import pallas as pl
from jax.experimental.pallas import tpu as pltpu


def lstm_kernel(x_ref,                         # (1, T*Bb, D)   bf16, time-major rows per block
                wih0_ref, whh0_ref, b0_ref,    # layer 0: (D,4H) bf16, (H,4H) bf16, (1,4H) f32
                w1_ref, b1_ref,                # layer 1 fused: (2H,4H) bf16 = [W_ih1;W_hh1], (1,4H) f32
                wfc_ref, bfc_ref,              # final Linear: (H,O) bf16, (1,O) f32
                out_ref,                       # (Bb, O) f32
                xg_scr,                        # (Tc*Bb, 4H) f32 VMEM scratch
                *, hidden_dim, seq_len, block_b, chunk_t, step_unroll):
    H = hidden_dim
    Bb = block_b
    Tc = chunk_t
    n_chunks = seq_len // chunk_t

    # Hoist weight loads / bias broadcast out of all loops (JAX does not CSE broadcasts).
    wih0 = wih0_ref[...]
    whh0 = whh0_ref[...]
    w1 = w1_ref[...]
    b0 = b0_ref[...]
    b1_full = jnp.broadcast_to(b1_ref[...], (Bb, 4 * H))

    def sigmoid_t(g):
        # tanh-form sigmoid: a single EUP transcendental instead of exp + divide.
        return 0.5 * (jnp.tanh(0.5 * g) + 1.0)

    def gate_combine(gates, c_prev):
        # Two full-width EUP passes; torch gate order (i, f, g, o).
        sg = sigmoid_t(gates)
        th = jnp.tanh(gates)
        i = sg[:, 0 * H:1 * H]
        f = sg[:, 1 * H:2 * H]
        g = th[:, 2 * H:3 * H]
        o = sg[:, 3 * H:4 * H]
        c_new = f * c_prev + i * g
        h_new = o * jnp.tanh(c_new)
        return h_new, c_new

    def project_chunk(row0):
        # Layer-0 input projection for a whole chunk of timesteps in ONE MXU matmul
        # (M = Tc*Bb); it does not depend on the recurrence, bias folded in once.
        xc = x_ref[0, pl.ds(row0, Tc * Bb), :]                    # already bf16
        xg_scr[...] = jnp.dot(xc, wih0, preferred_element_type=jnp.float32) + b0

    def step(t, carry):
        h0, c0, h1, c1 = carry                                    # each (Bb, H) f32
        row = pl.multiple_of(t * Bb, Bb)                          # sublane-aligned start
        # ---- layer 0: only the recurrent matmul remains on the serial chain ----
        gates0 = xg_scr[pl.ds(row, Bb), :] + jnp.dot(
            h0.astype(jnp.bfloat16), whh0, preferred_element_type=jnp.float32)
        h0n, c0n = gate_combine(gates0, c0)
        # ---- layer 1: single fused K=2H matmul  [h0_new | h1] @ [W_ih1; W_hh1] ----
        lhs1 = jnp.concatenate([h0n, h1], axis=1).astype(jnp.bfloat16)   # (Bb, 2H)
        gates1 = jnp.dot(lhs1, w1, preferred_element_type=jnp.float32) + b1_full
        h1n, c1n = gate_combine(gates1, c1)
        return h0n, c0n, h1n, c1n

    def run_chunk(carry):
        return lax.fori_loop(0, Tc, step, carry, unroll=step_unroll)

    z = jnp.zeros((Bb, H), jnp.float32)
    carry = (z, z, z, z)
    if n_chunks == 1:
        project_chunk(0)
        carry = run_chunk(carry)
    else:
        def chunk_body(ci, c):
            project_chunk(pl.multiple_of(ci * (Tc * Bb), Bb))
            return run_chunk(c)
        carry = lax.fori_loop(0, n_chunks, chunk_body, carry)

    _, _, h1, _ = carry

    # ---- final Linear on the last timestep's top-layer hidden ----
    # (O is tiny here; pad to a multiple of 128 lanes in the wrapper if it ever grows.)
    out_ref[...] = (jnp.dot(h1.astype(jnp.bfloat16), wfc_ref[...],
                            preferred_element_type=jnp.float32)
                    + bfc_ref[...]).astype(out_ref.dtype)


def _pick_block_batch(B):
    """Grow toward 128 rows per block; prefer >= 2 blocks so v7x's 2nd TensorCore gets work."""
    if B <= 8:
        return B
    for bb in (128, 64, 32, 16, 8):
        if bb <= B // 2 and B % bb == 0:
            return bb
    return B if B <= 128 else 8


def _pick_chunk_t(T):
    """Chunk the fused layer-0 projection over T so the f32 scratch stays VMEM-friendly."""
    if T <= 256:
        return T
    for ct in (256, 128):
        if T % ct == 0:
            return ct
    # TODO(synk): ragged chunking for large T not divisible by 128/256 (raise vmem limit instead).
    return T


def lstm_model_forward(x, params, *, hidden_dim, layer_dim, output_dim, block_batch=None):
    """x: (B, input_dim, T) float32  -> (B, output_dim) float32 (matches the PyTorch module)."""
    assert layer_dim == 2, "kernel is specialized for layer_dim=2"
    B, D, T = x.shape
    H = hidden_dim
    O = output_dim

    Bb = _pick_block_batch(B) if block_batch is None else block_batch
    assert B % Bb == 0, "batch must be divisible by block_batch"
    nb = B // Bb
    Tc = _pick_chunk_t(T)
    assert T % Tc == 0
    step_unroll = True if Tc <= 16 else 8      # partial unroll for long chunks (vreg pressure)

    (wih0, whh0, b0, wih1, whh1, b1, wfc, bfc) = params

    bf = jnp.bfloat16
    wih0_b = wih0.astype(bf)
    whh0_b = whh0.astype(bf)
    w1_b = jnp.concatenate([wih1, whh1], axis=0).astype(bf)     # (2H, 4H): fused layer-1 weight
    wfc_b = wfc.astype(bf)

    # (B, D, T) -> (T, B, D) -> (nb, T*Bb, D): per batch block, time-major contiguous rows,
    # cast to bf16 in the wrapper so the streamed input DMA moves half the bytes.
    x_tm = jnp.transpose(x, (2, 0, 1))
    x_blk = (x_tm.reshape(T, nb, Bb, D)
                 .transpose(1, 0, 2, 3)
                 .reshape(nb, T * Bb, D)
                 .astype(bf))

    kernel = functools.partial(lstm_kernel, hidden_dim=H, seq_len=T, block_b=Bb,
                               chunk_t=Tc, step_unroll=step_unroll)

    def const_spec(shape):
        return pl.BlockSpec(shape, lambda b: (0,) * len(shape))

    return pl.pallas_call(
        kernel,
        out_shape=jax.ShapeDtypeStruct((B, O), jnp.float32),
        grid=(nb,),                                             # batch blocks only; time is in-kernel
        in_specs=[
            pl.BlockSpec((1, T * Bb, D), lambda b: (b, 0, 0)),  # x, one batch block (bf16)
            const_spec((D, 4 * H)),                             # W_ih layer 0 (bf16)
            const_spec((H, 4 * H)),                             # W_hh layer 0 (bf16)
            const_spec((1, 4 * H)),                             # bias layer 0 (f32)
            const_spec((2 * H, 4 * H)),                         # fused [W_ih1; W_hh1] (bf16)
            const_spec((1, 4 * H)),                             # bias layer 1 (f32)
            const_spec((H, O)),                                 # fc weight (bf16)
            const_spec((1, O)),                                 # fc bias (f32)
        ],
        out_specs=pl.BlockSpec((Bb, O), lambda b: (b, 0)),
        scratch_shapes=[pltpu.VMEM((Tc * Bb, 4 * H), jnp.float32)],   # chunked input-gate scratch
        compiler_params=pltpu.CompilerParams(
            dimension_semantics=("parallel",),                  # batch blocks independent (v7x 2 TCs)
        ),
    )(x_blk, wih0_b, whh0_b, b0, w1_b, b1, wfc_b, bfc)


def make_params(key, input_dim, hidden_dim, output_dim):
    """Deterministic synthetic parameters (pre-transposed, biases merged b_ih+b_hh)."""
    H = hidden_dim
    keys = jax.random.split(key, 8)
    scale = 0.1
    wih0 = scale * jax.random.normal(keys[0], (input_dim, 4 * H), jnp.float32)
    whh0 = scale * jax.random.normal(keys[1], (H, 4 * H), jnp.float32)
    b0 = scale * jax.random.normal(keys[2], (1, 4 * H), jnp.float32)
    wih1 = scale * jax.random.normal(keys[3], (H, 4 * H), jnp.float32)
    whh1 = scale * jax.random.normal(keys[4], (H, 4 * H), jnp.float32)
    b1 = scale * jax.random.normal(keys[5], (1, 4 * H), jnp.float32)
    wfc = scale * jax.random.normal(keys[6], (H, output_dim), jnp.float32)
    bfc = scale * jax.random.normal(keys[7], (1, output_dim), jnp.float32)
    return (wih0, whh0, b0, wih1, whh1, b1, wfc, bfc)


def reference_forward(x, params, hidden_dim):
    """Pure-JAX reference matching torch.nn.LSTM(batch_first=True) + Linear semantics,
    with the same bf16-operand / f32-accumulation matmul convention as the kernel."""
    (wih0, whh0, b0, wih1, whh1, b1, wfc, bfc) = params
    B, D, T = x.shape
    H = hidden_dim
    xs = jnp.transpose(x, (0, 2, 1))  # (B, T, D)

    def mm(a, w):
        return jnp.dot(a.astype(jnp.bfloat16), w.astype(jnp.bfloat16),
                       preferred_element_type=jnp.float32)

    def cell(inp, h, c, wih, whh, b):
        g = mm(inp, wih) + mm(h, whh) + b
        i = jax.nn.sigmoid(g[:, 0 * H:1 * H])
        f = jax.nn.sigmoid(g[:, 1 * H:2 * H])
        gg = jnp.tanh(g[:, 2 * H:3 * H])
        o = jax.nn.sigmoid(g[:, 3 * H:4 * H])
        c_new = f * c + i * gg
        return o * jnp.tanh(c_new), c_new

    h0 = jnp.zeros((B, H), jnp.float32); c0 = jnp.zeros((B, H), jnp.float32)
    h1 = jnp.zeros((B, H), jnp.float32); c1 = jnp.zeros((B, H), jnp.float32)
    for t in range(T):
        h0, c0 = cell(xs[:, t, :], h0, c0, wih0, whh0, b0)
        h1, c1 = cell(h0, h1, c1, wih1, whh1, b1)
    return mm(h1, wfc) + bfc


if __name__ == "__main__":
    config = dict(input_dim=8, hidden_dim=32, layer_dim=2, output_dim=4)
    B, T = 16, 8   # B=16 -> 2 batch blocks of 8, so the "parallel" axis can use both v7x TCs

    key = jax.random.PRNGKey(0)
    kx, kp = jax.random.split(key)
    # x matches the PyTorch module's expected input: (batch, input_dim, seq)
    x = jax.random.normal(kx, (B, config["input_dim"], T), jnp.float32)
    params = make_params(kp, config["input_dim"], config["hidden_dim"], config["output_dim"])

    out = lstm_model_forward(
        x, params,
        hidden_dim=config["hidden_dim"],
        layer_dim=config["layer_dim"],
        output_dim=config["output_dim"],
    )
    out = jax.block_until_ready(out)

    ref = reference_forward(x, params, config["hidden_dim"])
    assert out.shape == (B, config["output_dim"])
    # kernel uses the tanh-form sigmoid and a fused K=2H layer-1 matmul (algebraically
    # identical; tolerance covers bf16 rounding divergence over the recurrence)
    assert jnp.allclose(out, ref, atol=2e-3, rtol=2e-2), "mismatch vs pure-JAX reference"

    print("KERNEL_OK")
</pallas_src>

<mosaic_0001>
module attributes {stable_mosaic.version = 11 : i64} {
  func.func @lstm_kernel(%arg0: i32, %arg1: memref<1x64x8xbf16, #tpu.memory_space<vmem>>, %arg2: memref<8x128xbf16, #tpu.memory_space<vmem>>, %arg3: memref<32x128xbf16, #tpu.memory_space<vmem>>, %arg4: memref<1x128xf32, #tpu.memory_space<vmem>>, %arg5: memref<64x128xbf16, #tpu.memory_space<vmem>>, %arg6: memref<1x128xf32, #tpu.memory_space<vmem>>, %arg7: memref<32x4xbf16, #tpu.memory_space<vmem>>, %arg8: memref<1x4xf32, #tpu.memory_space<vmem>>, %arg9: memref<8x4xf32, #tpu.memory_space<vmem>>, %arg10: memref<64x128xf32, #tpu.memory_space<vmem>>) attributes {dimension_semantics = [#tpu.dimension_semantics<parallel>], iteration_bounds = array<i64: 2>, scalar_prefetch = 0 : i64, scratch_operands = 1 : i64, tpu.core_type = #tpu.core_type<tc>, window_params = [{transform_indices = @transform_0, window_bounds = array<i64: 1, 64, 8>}, {pipeline_mode = #tpu.pipeline_mode<synchronous>, transform_indices = @transform_1, window_bounds = array<i64: 8, 128>}, {pipeline_mode = #tpu.pipeline_mode<synchronous>, transform_indices = @transform_2, window_bounds = array<i64: 32, 128>}, {pipeline_mode = #tpu.pipeline_mode<synchronous>, transform_indices = @transform_3, window_bounds = array<i64: 1, 128>}, {pipeline_mode = #tpu.pipeline_mode<synchronous>, transform_indices = @transform_4, window_bounds = array<i64: 64, 128>}, {pipeline_mode = #tpu.pipeline_mode<synchronous>, transform_indices = @transform_5, window_bounds = array<i64: 1, 128>}, {pipeline_mode = #tpu.pipeline_mode<synchronous>, transform_indices = @transform_6, window_bounds = array<i64: 32, 4>}, {pipeline_mode = #tpu.pipeline_mode<synchronous>, transform_indices = @transform_7, window_bounds = array<i64: 1, 4>}, {transform_indices = @transform_8, window_bounds = array<i64: 8, 4>}]} {
    %c0 = arith.constant 0 : index
    %c0_0 = arith.constant 0 : index
    %0 = vector.load %arg2[%c0, %c0_0] : memref<8x128xbf16, #tpu.memory_space<vmem>>, vector<8x128xbf16>
    %c0_1 = arith.constant 0 : index
    %c0_2 = arith.constant 0 : index
    %1 = vector.load %arg3[%c0_1, %c0_2] : memref<32x128xbf16, #tpu.memory_space<vmem>>, vector<32x128xbf16>
    %c0_3 = arith.constant 0 : index
    %c0_4 = arith.constant 0 : index
    %2 = vector.load %arg5[%c0_3, %c0_4] : memref<64x128xbf16, #tpu.memory_space<vmem>>, vector<64x128xbf16>
    %c0_5 = arith.constant 0 : index
    %c0_6 = arith.constant 0 : index
    %3 = vector.load %arg4[%c0_5, %c0_6] : memref<1x128xf32, #tpu.memory_space<vmem>>, vector<1x128xf32>
    %c0_7 = arith.constant 0 : index
    %c0_8 = arith.constant 0 : index
    %4 = vector.load %arg6[%c0_7, %c0_8] : memref<1x128xf32, #tpu.memory_space<vmem>>, vector<1x128xf32>
    %5 = vector.shape_cast %4 : vector<1x128xf32> to vector<1x128xf32>
    %6 = vector.broadcast %5 : vector<1x128xf32> to vector<8x128xf32>
    %cst = arith.constant 0.000000e+00 : f32
    %7 = vector.broadcast %cst : f32 to vector<8x32xf32>
    %c0_9 = arith.constant 0 : index
    %c0_10 = arith.constant 0 : index
    %c0_11 = arith.constant 0 : index
    %8 = vector.load %arg1[%c0_9, %c0_10, %c0_11] : memref<1x64x8xbf16, #tpu.memory_space<vmem>>, vector<1x64x8xbf16>
    %9 = vector.shape_cast %8 : vector<1x64x8xbf16> to vector<64x8xbf16>
    %cst_12 = arith.constant dense<0.000000e+00> : vector<64x128xf32>
    %10 = tpu.matmul %9, %0, %cst_12 {dimension_numbers = #tpu.dot_dimension_numbers<[1], [0], [0], [1], [0, 0, 1, 1], [], []>} : vector<64x8xbf16>, vector<8x128xbf16>, vector<64x128xf32> -> vector<64x128xf32>
    %11 = vector.broadcast %3 : vector<1x128xf32> to vector<64x128xf32>
    %12 = arith.addf %10, %11 : vector<64x128xf32>
    %c0_13 = arith.constant 0 : index
    %c0_14 = arith.constant 0 : index
    %13 = vector.load %arg10[%c0_13, %c0_14] : memref<64x128xf32, #tpu.memory_space<vmem>>, vector<64x128xf32>
    tpu.vector_store %arg10[%c0_13, %c0_14], %12 {strides = array<i32>} : memref<64x128xf32, #tpu.memory_space<vmem>>, vector<64x128xf32>,
    %c0_i32 = arith.constant 0 : i32
    %c8_i32 = arith.constant 8 : i32
    %14 = arith.muli %c0_i32, %c8_i32 : i32
    %15 = tpu.assume_multiple %14, 8 : i32
    %16 = arith.index_cast %15 : i32 to index
    %c0_15 = arith.constant 0 : index
    %17 = vector.load %arg10[%16, %c0_15] : memref<64x128xf32, #tpu.memory_space<vmem>>, vector<8x128xf32>
    %18 = arith.truncf %7 : vector<8x32xf32> to vector<8x32xbf16>
    %cst_16 = arith.constant dense<0.000000e+00> : vector<8x128xf32>
    %19 = tpu.matmul %18, %1, %cst_16 {dimension_numbers = #tpu.dot_dimension_numbers<[1], [0], [0], [1], [0, 0, 1, 1], [], []>} : vector<8x32xbf16>, vector<32x128xbf16>, vector<8x128xf32> -> vector<8x128xf32>
    %20 = arith.addf %17, %19 : vector<8x128xf32>
    %cst_17 = arith.constant 5.000000e-01 : f32
    %21 = vector.broadcast %cst_17 : f32 to vector<8x128xf32>
    %22 = arith.mulf %21, %20 : vector<8x128xf32>
    %23 = math.tanh %22 : vector<8x128xf32>
    %cst_18 = arith.constant 1.000000e+00 : f32
    %24 = vector.broadcast %cst_18 : f32 to vector<8x128xf32>
    %25 = arith.addf %23, %24 : vector<8x128xf32>
    %cst_19 = arith.constant 5.000000e-01 : f32
    %26 = vector.broadcast %cst_19 : f32 to vector<8x128xf32>
    %27 = arith.mulf %26, %25 : vector<8x128xf32>
    %28 = math.tanh %20 : vector<8x128xf32>
    %29 = vector.extract_strided_slice %27 {offsets = [0, 0], sizes = [8, 32], strides = [1, 1]} : vector<8x128xf32> to vector<8x32xf32>
    %30 = vector.extract_strided_slice %27 {offsets = [0, 32], sizes = [8, 32], strides = [1, 1]} : vector<8x128xf32> to vector<8x32xf32>
    %31 = vector.extract_strided_slice %28 {offsets = [0, 64], sizes = [8, 32], strides = [1, 1]} : vector<8x128xf32> to vector<8x32xf32>
    %32 = vector.extract_strided_slice %27 {offsets = [0, 96], sizes = [8, 32], strides = [1, 1]} : vector<8x128xf32> to vector<8x32xf32>
    %33 = arith.mulf %30, %7 : vector<8x32xf32>
    %34 = arith.mulf %29, %31 : vector<8x32xf32>
    %35 = arith.addf %33, %34 : vector<8x32xf32>
    %36 = math.tanh %35 : vector<8x32xf32>
    %37 = arith.mulf %32, %36 : vector<8x32xf32>
    %38 = tpu.concatenate %37, %7 in 1 : vector<8x32xf32>, vector<8x32xf32> -> vector<8x64xf32>
    %39 = arith.truncf %38 : vector<8x64xf32> to vector<8x64xbf16>
    %cst_20 = arith.constant dense<0.000000e+00> : vector<8x128xf32>
    %40 = tpu.matmul %39, %2, %cst_20 {dimension_numbers = #tpu.dot_dimension_numbers<[1], [0], [0], [1], [0, 0, 1, 1], [], []>} : vector<8x64xbf16>, vector<64x128xbf16>, vector<8x128xf32> -> vector<8x128xf32>
    %41 = arith.addf %40, %6 : vector<8x128xf32>
    %cst_21 = arith.constant 5.000000e-01 : f32
    %42 = vector.broadcast %cst_21 : f32 to vector<8x128xf32>
    %43 = arith.mulf %42, %41 : vector<8x128xf32>
    %44 = math.tanh %43 : vector<8x128xf32>
    %cst_22 = arith.constant 1.000000e+00 : f32
    %45 = vector.broadcast %cst_22 : f32 to vector<8x128xf32>
    %46 = arith.addf %44, %45 : vector<8x128xf32>
    %cst_23 = arith.constant 5.000000e-01 : f32
    %47 = vector.broadcast %cst_23 : f32 to vector<8x128xf32>
    %48 = arith.mulf %47, %46 : vector<8x128xf32>
    %49 = math.tanh %41 : vector<8x128xf32>
    %50 = vector.extract_strided_slice %48 {offsets = [0, 0], sizes = [8, 32], strides = [1, 1]} : vector<8x128xf32> to vector<8x32xf32>
    %51 = vector.extract_strided_slice %48 {offsets = [0, 32], sizes = [8, 32], strides = [1, 1]} : vector<8x128xf32> to vector<8x32xf32>
    %52 = vector.extract_strided_slice %49 {offsets = [0, 64], sizes = [8, 32], strides = [1, 1]} : vector<8x128xf32> to vector<8x32xf32>
    %53 = vector.extract_strided_slice %48 {offsets = [0, 96], sizes = [8, 32], strides = [1, 1]} : vector<8x128xf32> to vector<8x32xf32>
    %54 = arith.mulf %51, %7 : vector<8x32xf32>
    %55 = arith.mulf %50, %52 : vector<8x32xf32>
    %56 = arith.addf %54, %55 : vector<8x32xf32>
    %57 = math.tanh %56 : vector<8x32xf32>
    %58 = arith.mulf %53, %57 : vector<8x32xf32>
    %c1_i32 = arith.constant 1 : i32
    %c8_i32_24 = arith.constant 8 : i32
    %59 = arith.muli %c1_i32, %c8_i32_24 : i32
    %60 = tpu.assume_multiple %59, 8 : i32
    %61 = arith.index_cast %60 : i32 to index
    %c0_25 = arith.constant 0 : index
    %62 = vector.load %arg10[%61, %c0_25] : memref<64x128xf32, #tpu.memory_space<vmem>>, vector<8x128xf32>
    %63 = arith.truncf %37 : vector<8x32xf32> to vector<8x32xbf16>
    %cst_26 = arith.constant dense<0.000000e+00> : vector<8x128xf32>
    %64 = tpu.matmul %63, %1, %cst_26 {dimension_numbers = #tpu.dot_dimension_numbers<[1], [0], [0], [1], [0, 0, 1, 1], [], []>} : vector<8x32xbf16>, vector<32x128xbf16>, vector<8x128xf32> -> vector<8x128xf32>
    %65 = arith.addf %62, %64 : vector<8x128xf32>
    %cst_27 = arith.constant 5.000000e-01 : f32
    %66 = vector.broadcast %cst_27 : f32 to vector<8x128xf32>
    %67 = arith.mulf %66, %65 : vector<8x128xf32>
    %68 = math.tanh %67 : vector<8x128xf32>
    %cst_28 = arith.constant 1.000000e+00 : f32
    %69 = vector.broadcast %cst_28 : f32 to vector<8x128xf32>
    %70 = arith.addf %68, %69 : vector<8x128xf32>
    %cst_29 = arith.constant 5.000000e-01 : f32
    %71 = vector.broadcast %cst_29 : f32 to vector<8x128xf32>
    %72 = arith.mulf %71, %70 : vector<8x128xf32>
    %73 = math.tanh %65 : vector<8x128xf32>
    %74 = vector.extract_strided_slice %72 {offsets = [0, 0], sizes = [8, 32], strides = [1, 1]} : vector<8x128xf32> to vector<8x32xf32>
    %75 = vector.extract_strided_slice %72 {offsets = [0, 32], sizes = [8, 32], strides = [1, 1]} : vector<8x128xf32> to vector<8x32xf32>
    %76 = vector.extract_strided_slice %73 {offsets = [0, 64], sizes = [8, 32], strides = [1, 1]} : vector<8x128xf32> to vector<8x32xf32>
    %77 = vector.extract_strided_slice %72 {offsets = [0, 96], sizes = [8, 32], strides = [1, 1]} : vector<8x128xf32> to vector<8x32xf32>
    %78 = arith.mulf %75, %35 : vector<8x32xf32>
    %79 = arith.mulf %74, %76 : vector<8x32xf32>
    %80 = arith.addf %78, %79 : vector<8x32xf32>
    %81 = math.tanh %80 : vector<8x32xf32>
    %82 = arith.mulf %77, %81 : vector<8x32xf32>
    %83 = tpu.concatenate %82, %58 in 1 : vector<8x32xf32>, vector<8x32xf32> -> vector<8x64xf32>
    %84 = arith.truncf %83 : vector<8x64xf32> to vector<8x64xbf16>
    %cst_30 = arith.constant dense<0.000000e+00> : vector<8x128xf32>
    %85 = tpu.matmul %84, %2, %cst_30 {dimension_numbers = #tpu.dot_dimension_numbers<[1], [0], [0], [1], [0, 0, 1, 1], [], []>} : vector<8x64xbf16>, vector<64x128xbf16>, vector<8x128xf32> -> vector<8x128xf32>
    %86 = arith.addf %85, %6 : vector<8x128xf32>
    %cst_31 = arith.constant 5.000000e-01 : f32
    %87 = vector.broadcast %cst_31 : f32 to vector<8x128xf32>
    %88 = arith.mulf %87, %86 : vector<8x128xf32>
    %89 = math.tanh %88 : vector<8x128xf32>
    %cst_32 = arith.constant 1.000000e+00 : f32
    %90 = vector.broadcast %cst_32 : f32 to vector<8x128xf32>
    %91 = arith.addf %89, %90 : vector<8x128xf32>
    %cst_33 = arith.constant 5.000000e-01 : f32
    %92 = vector.broadcast %cst_33 : f32 to vector<8x128xf32>
    %93 = arith.mulf %92, %91 : vector<8x128xf32>
    %94 = math.tanh %86 : vector<8x128xf32>
    %95 = vector.extract_strided_slice %93 {offsets = [0, 0], sizes = [8, 32], strides = [1, 1]} : vector<8x128xf32> to vector<8x32xf32>
    %96 = vector.extract_strided_slice %93 {offsets = [0, 32], sizes = [8, 32], strides = [1, 1]} : vector<8x128xf32> to vector<8x32xf32>
    %97 = vector.extract_strided_slice %94 {offsets = [0, 64], sizes = [8, 32], strides = [1, 1]} : vector<8x128xf32> to vector<8x32xf32>
    %98 = vector.extract_strided_slice %93 {offsets = [0, 96], sizes = [8, 32], strides = [1, 1]} : vector<8x128xf32> to vector<8x32xf32>
    %99 = arith.mulf %96, %56 : vector<8x32xf32>
    %100 = arith.mulf %95, %97 : vector<8x32xf32>
    %101 = arith.addf %99, %100 : vector<8x32xf32>
    %102 = math.tanh %101 : vector<8x32xf32>
    %103 = arith.mulf %98, %102 : vector<8x32xf32>
    %c2_i32 = arith.constant 2 : i32
    %c8_i32_34 = arith.constant 8 : i32
    %104 = arith.muli %c2_i32, %c8_i32_34 : i32
    %105 = tpu.assume_multiple %104, 8 : i32
    %106 = arith.index_cast %105 : i32 to index
    %c0_35 = arith.constant 0 : index
    %107 = vector.load %arg10[%106, %c0_35] : memref<64x128xf32, #tpu.memory_space<vmem>>, vector<8x128xf32>
    %108 = arith.truncf %82 : vector<8x32xf32> to vector<8x32xbf16>
    %cst_36 = arith.constant dense<0.000000e+00> : vector<8x128xf32>
    %109 = tpu.matmul %108, %1, %cst_36 {dimension_numbers = #tpu.dot_dimension_numbers<[1], [0], [0], [1], [0, 0, 1, 1], [], []>} : vector<8x32xbf16>, vector<32x128xbf16>, vector<8x128xf32> -> vector<8x128xf32>
    %110 = arith.addf %107, %109 : vector<8x128xf32>
    %cst_37 = arith.constant 5.000000e-01 : f32
    %111 = vector.broadcast %cst_37 : f32 to vector<8x128xf32>
    %112 = arith.mulf %111, %110 : vector<8x128xf32>
    %113 = math.tanh %112 : vector<8x128xf32>
    %cst_38 = arith.constant 1.000000e+00 : f32
    %114 = vector.broadcast %cst_38 : f32 to vector<8x128xf32>
    %115 = arith.addf %113, %114 : vector<8x128xf32>
    %cst_39 = arith.constant 5.000000e-01 : f32
    %116 = vector.broadcast %cst_39 : f32 to vector<8x128xf32>
    %117 = arith.mulf %116, %115 : vector<8x128xf32>
    %118 = math.tanh %110 : vector<8x128xf32>
    %119 = vector.extract_strided_slice %117 {offsets = [0, 0], sizes = [8, 32], strides = [1, 1]} : vector<8x128xf32> to vector<8x32xf32>
    %120 = vector.extract_strided_slice %117 {offsets = [0, 32], sizes = [8, 32], strides = [1, 1]} : vector<8x128xf32> to vector<8x32xf32>
    %121 = vector.extract_strided_slice %118 {offsets = [0, 64], sizes = [8, 32], strides = [1, 1]} : vector<8x128xf32> to vector<8x32xf32>
    %122 = vector.extract_strided_slice %117 {offsets = [0, 96], sizes = [8, 32], strides = [1, 1]} : vector<8x128xf32> to vector<8x32xf32>
    %123 = arith.mulf %120, %80 : vector<8x32xf32>
    %124 = arith.mulf %119, %121 : vector<8x32xf32>
    %125 = arith.addf %123, %124 : vector<8x32xf32>
    %126 = math.tanh %125 : vector<8x32xf32>
    %127 = arith.mulf %122, %126 : vector<8x32xf32>
    %128 = tpu.concatenate %127, %103 in 1 : vector<8x32xf32>, vector<8x32xf32> -> vector<8x64xf32>
    %129 = arith.truncf %128 : vector<8x64xf32> to vector<8x64xbf16>
    %cst_40 = arith.constant dense<0.000000e+00> : vector<8x128xf32>
    %130 = tpu.matmul %129, %2, %cst_40 {dimension_numbers = #tpu.dot_dimension_numbers<[1], [0], [0], [1], [0, 0, 1, 1], [], []>} : vector<8x64xbf16>, vector<64x128xbf16>, vector<8x128xf32> -> vector<8x128xf32>
    %131 = arith.addf %130, %6 : vector<8x128xf32>
    %cst_41 = arith.constant 5.000000e-01 : f32
    %132 = vector.broadcast %cst_41 : f32 to vector<8x128xf32>
    %133 = arith.mulf %132, %131 : vector<8x128xf32>
    %134 = math.tanh %133 : vector<8x128xf32>
    %cst_42 = arith.constant 1.000000e+00 : f32
    %135 = vector.broadcast %cst_42 : f32 to vector<8x128xf32>
    %136 = arith.addf %134, %135 : vector<8x128xf32>
    %cst_43 = arith.constant 5.000000e-01 : f32
    %137 = vector.broadcast %cst_43 : f32 to vector<8x128xf32>
    %138 = arith.mulf %137, %136 : vector<8x128xf32>
    %139 = math.tanh %131 : vector<8x128xf32>
    %140 = vector.extract_strided_slice %138 {offsets = [0, 0], sizes = [8, 32], strides = [1, 1]} : vector<8x128xf32> to vector<8x32xf32>
    %141 = vector.extract_strided_slice %138 {offsets = [0, 32], sizes = [8, 32], strides = [1, 1]} : vector<8x128xf32> to vector<8x32xf32>
    %142 = vector.extract_strided_slice %139 {offsets = [0, 64], sizes = [8, 32], strides = [1, 1]} : vector<8x128xf32> to vector<8x32xf32>
    %143 = vector.extract_strided_slice %138 {offsets = [0, 96], sizes = [8, 32], strides = [1, 1]} : vector<8x128xf32> to vector<8x32xf32>
    %144 = arith.mulf %141, %101 : vector<8x32xf32>
    %145 = arith.mulf %140, %142 : vector<8x32xf32>
    %146 = arith.addf %144, %145 : vector<8x32xf32>
    %147 = math.tanh %146 : vector<8x32xf32>
    %148 = arith.mulf %143, %147 : vector<8x32xf32>
    %c3_i32 = arith.constant 3 : i32
    %c8_i32_44 = arith.constant 8 : i32
    %149 = arith.muli %c3_i32, %c8_i32_44 : i32
    %150 = tpu.assume_multiple %149, 8 : i32
    %151 = arith.index_cast %150 : i32 to index
    %c0_45 = arith.constant 0 : index
    %152 = vector.load %arg10[%151, %c0_45] : memref<64x128xf32, #tpu.memory_space<vmem>>, vector<8x128xf32>
    %153 = arith.truncf %127 : vector<8x32xf32> to vector<8x32xbf16>
    %cst_46 = arith.constant dense<0.000000e+00> : vector<8x128xf32>
    %154 = tpu.matmul %153, %1, %cst_46 {dimension_numbers = #tpu.dot_dimension_numbers<[1], [0], [0], [1], [0, 0, 1, 1], [], []>} : vector<8x32xbf16>, vector<32x128xbf16>, vector<8x128xf32> -> vector<8x128xf32>
    %155 = arith.addf %152, %154 : vector<8x128xf32>
    %cst_47 = arith.constant 5.000000e-01 : f32
    %156 = vector.broadcast %cst_47 : f32 to vector<8x128xf32>
    %157 = arith.mulf %156, %155 : vector<8x128xf32>
    %158 = math.tanh %157 : vector<8x128xf32>
    %cst_48 = arith.constant 1.000000e+00 : f32
    %159 = vector.broadcast %cst_48 : f32 to vector<8x128xf32>
    %160 = arith.addf %158, %159 : vector<8x128xf32>
    %cst_49 = arith.constant 5.000000e-01 : f32
    %161 = vector.broadcast %cst_49 : f32 to vector<8x128xf32>
    %162 = arith.mulf %161, %160 : vector<8x128xf32>
    %163 = math.tanh %155 : vector<8x128xf32>
    %164 = vector.extract_strided_slice %162 {offsets = [0, 0], sizes = [8, 32], strides = [1, 1]} : vector<8x128xf32> to vector<8x32xf32>
    %165 = vector.extract_strided_slice %162 {offsets = [0, 32], sizes = [8, 32], strides = [1, 1]} : vector<8x128xf32> to vector<8x32xf32>
    %166 = vector.extract_strided_slice %163 {offsets = [0, 64], sizes = [8, 32], strides = [1, 1]} : vector<8x128xf32> to vector<8x32xf32>
    %167 = vector.extract_strided_slice %162 {offsets = [0, 96], sizes = [8, 32], strides = [1, 1]} : vector<8x128xf32> to vector<8x32xf32>
    %168 = arith.mulf %165, %125 : vector<8x32xf32>
    %169 = arith.mulf %164, %166 : vector<8x32xf32>
    %170 = arith.addf %168, %169 : vector<8x32xf32>
    %171 = math.tanh %170 : vector<8x32xf32>
    %172 = arith.mulf %167, %171 : vector<8x32xf32>
    %173 = tpu.concatenate %172, %148 in 1 : vector<8x32xf32>, vector<8x32xf32> -> vector<8x64xf32>
    %174 = arith.truncf %173 : vector<8x64xf32> to vector<8x64xbf16>
    %cst_50 = arith.constant dense<0.000000e+00> : vector<8x128xf32>
    %175 = tpu.matmul %174, %2, %cst_50 {dimension_numbers = #tpu.dot_dimension_numbers<[1], [0], [0], [1], [0, 0, 1, 1], [], []>} : vector<8x64xbf16>, vector<64x128xbf16>, vector<8x128xf32> -> vector<8x128xf32>
    %176 = arith.addf %175, %6 : vector<8x128xf32>
    %cst_51 = arith.constant 5.000000e-01 : f32
    %177 = vector.broadcast %cst_51 : f32 to vector<8x128xf32>
    %178 = arith.mulf %177, %176 : vector<8x128xf32>
    %179 = math.tanh %178 : vector<8x128xf32>
    %cst_52 = arith.constant 1.000000e+00 : f32
    %180 = vector.broadcast %cst_52 : f32 to vector<8x128xf32>
    %181 = arith.addf %179, %180 : vector<8x128xf32>
    %cst_53 = arith.constant 5.000000e-01 : f32
    %182 = vector.broadcast %cst_53 : f32 to vector<8x128xf32>
    %183 = arith.mulf %182, %181 : vector<8x128xf32>
    %184 = math.tanh %176 : vector<8x128xf32>
    %185 = vector.extract_strided_slice %183 {offsets = [0, 0], sizes = [8, 32], strides = [1, 1]} : vector<8x128xf32> to vector<8x32xf32>
    %186 = vector.extract_strided_slice %183 {offsets = [0, 32], sizes = [8, 32], strides = [1, 1]} : vector<8x128xf32> to vector<8x32xf32>
    %187 = vector.extract_strided_slice %184 {offsets = [0, 64], sizes = [8, 32], strides = [1, 1]} : vector<8x128xf32> to vector<8x32xf32>
    %188 = vector.extract_strided_slice %183 {offsets = [0, 96], sizes = [8, 32], strides = [1, 1]} : vector<8x128xf32> to vector<8x32xf32>
    %189 = arith.mulf %186, %146 : vector<8x32xf32>
    %190 = arith.mulf %185, %187 : vector<8x32xf32>
    %191 = arith.addf %189, %190 : vector<8x32xf32>
    %192 = math.tanh %191 : vector<8x32xf32>
    %193 = arith.mulf %188, %192 : vector<8x32xf32>
    %c4_i32 = arith.constant 4 : i32
    %c8_i32_54 = arith.constant 8 : i32
    %194 = arith.muli %c4_i32, %c8_i32_54 : i32
    %195 = tpu.assume_multiple %194, 8 : i32
    %196 = arith.index_cast %195 : i32 to index
    %c0_55 = arith.constant 0 : index
    %197 = vector.load %arg10[%196, %c0_55] : memref<64x128xf32, #tpu.memory_space<vmem>>, vector<8x128xf32>
    %198 = arith.truncf %172 : vector<8x32xf32> to vector<8x32xbf16>
    %cst_56 = arith.constant dense<0.000000e+00> : vector<8x128xf32>
    %199 = tpu.matmul %198, %1, %cst_56 {dimension_numbers = #tpu.dot_dimension_numbers<[1], [0], [0], [1], [0, 0, 1, 1], [], []>} : vector<8x32xbf16>, vector<32x128xbf16>, vector<8x128xf32> -> vector<8x128xf32>
    %200 = arith.addf %197, %199 : vector<8x128xf32>
    %cst_57 = arith.constant 5.000000e-01 : f32
    %201 = vector.broadcast %cst_57 : f32 to vector<8x128xf32>
    %202 = arith.mulf %201, %200 : vector<8x128xf32>
    %203 = math.tanh %202 : vector<8x128xf32>
    %cst_58 = arith.constant 1.000000e+00 : f32
    %204 = vector.broadcast %cst_58 : f32 to vector<8x128xf32>
    %205 = arith.addf %203, %204 : vector<8x128xf32>
    %cst_59 = arith.constant 5.000000e-01 : f32
    %206 = vector.broadcast %cst_59 : f32 to vector<8x128xf32>
    %207 = arith.mulf %206, %205 : vector<8x128xf32>
    %208 = math.tanh %200 : vector<8x128xf32>
    %209 = vector.extract_strided_slice %207 {offsets = [0, 0], sizes = [8, 32], strides = [1, 1]} : vector<8x128xf32> to vector<8x32xf32>
    %210 = vector.extract_strided_slice %207 {offsets = [0, 32], sizes = [8, 32], strides = [1, 1]} : vector<8x128xf32> to vector<8x32xf32>
    %211 = vector.extract_strided_slice %208 {offsets = [0, 64], sizes = [8, 32], strides = [1, 1]} : vector<8x128xf32> to vector<8x32xf32>
    %212 = vector.extract_strided_slice %207 {offsets = [0, 96], sizes = [8, 32], strides = [1, 1]} : vector<8x128xf32> to vector<8x32xf32>
    %213 = arith.mulf %210, %170 : vector<8x32xf32>
    %214 = arith.mulf %209, %211 : vector<8x32xf32>
    %215 = arith.addf %213, %214 : vector<8x32xf32>
    %216 = math.tanh %215 : vector<8x32xf32>
    %217 = arith.mulf %212, %216 : vector<8x32xf32>
    %218 = tpu.concatenate %217, %193 in 1 : vector<8x32xf32>, vector<8x32xf32> -> vector<8x64xf32>
    %219 = arith.truncf %218 : vector<8x64xf32> to vector<8x64xbf16>
    %cst_60 = arith.constant dense<0.000000e+00> : vector<8x128xf32>
    %220 = tpu.matmul %219, %2, %cst_60 {dimension_numbers = #tpu.dot_dimension_numbers<[1], [0], [0], [1], [0, 0, 1, 1], [], []>} : vector<8x64xbf16>, vector<64x128xbf16>, vector<8x128xf32> -> vector<8x128xf32>
    %221 = arith.addf %220, %6 : vector<8x128xf32>
    %cst_61 = arith.constant 5.000000e-01 : f32
    %222 = vector.broadcast %cst_61 : f32 to vector<8x128xf32>
    %223 = arith.mulf %222, %221 : vector<8x128xf32>
    %224 = math.tanh %223 : vector<8x128xf32>
    %cst_62 = arith.constant 1.000000e+00 : f32
    %225 = vector.broadcast %cst_62 : f32 to vector<8x128xf32>
    %226 = arith.addf %224, %225 : vector<8x128xf32>
    %cst_63 = arith.constant 5.000000e-01 : f32
    %227 = vector.broadcast %cst_63 : f32 to vector<8x128xf32>
    %228 = arith.mulf %227, %226 : vector<8x128xf32>
    %229 = math.tanh %221 : vector<8x128xf32>
    %230 = vector.extract_strided_slice %228 {offsets = [0, 0], sizes = [8, 32], strides = [1, 1]} : vector<8x128xf32> to vector<8x32xf32>
    %231 = vector.extract_strided_slice %228 {offsets = [0, 32], sizes = [8, 32], strides = [1, 1]} : vector<8x128xf32> to vector<8x32xf32>
    %232 = vector.extract_strided_slice %229 {offsets = [0, 64], sizes = [8, 32], strides = [1, 1]} : vector<8x128xf32> to vector<8x32xf32>
    %233 = vector.extract_strided_slice %228 {offsets = [0, 96], sizes = [8, 32], strides = [1, 1]} : vector<8x128xf32> to vector<8x32xf32>
    %234 = arith.mulf %231, %191 : vector<8x32xf32>
    %235 = arith.mulf %230, %232 : vector<8x32xf32>
    %236 = arith.addf %234, %235 : vector<8x32xf32>
    %237 = math.tanh %236 : vector<8x32xf32>
    %238 = arith.mulf %233, %237 : vector<8x32xf32>
    %c5_i32 = arith.constant 5 : i32
    %c8_i32_64 = arith.constant 8 : i32
    %239 = arith.muli %c5_i32, %c8_i32_64 : i32
    %240 = tpu.assume_multiple %239, 8 : i32
    %241 = arith.index_cast %240 : i32 to index
    %c0_65 = arith.constant 0 : index
    %242 = vector.load %arg10[%241, %c0_65] : memref<64x128xf32, #tpu.memory_space<vmem>>, vector<8x128xf32>
    %243 = arith.truncf %217 : vector<8x32xf32> to vector<8x32xbf16>
    %cst_66 = arith.constant dense<0.000000e+00> : vector<8x128xf32>
    %244 = tpu.matmul %243, %1, %cst_66 {dimension_numbers = #tpu.dot_dimension_numbers<[1], [0], [0], [1], [0, 0, 1, 1], [], []>} : vector<8x32xbf16>, vector<32x128xbf16>, vector<8x128xf32> -> vector<8x128xf32>
    %245 = arith.addf %242, %244 : vector<8x128xf32>
    %cst_67 = arith.constant 5.000000e-01 : f32
    %246 = vector.broadcast %cst_67 : f32 to vector<8x128xf32>
    %247 = arith.mulf %246, %245 : vector<8x128xf32>
    %248 = math.tanh %247 : vector<8x128xf32>
    %cst_68 = arith.constant 1.000000e+00 : f32
    %249 = vector.broadcast %cst_68 : f32 to vector<8x128xf32>
    %250 = arith.addf %248, %249 : vector<8x128xf32>
    %cst_69 = arith.constant 5.000000e-01 : f32
    %251 = vector.broadcast %cst_69 : f32 to vector<8x128xf32>
    %252 = arith.mulf %251, %250 : vector<8x128xf32>
    %253 = math.tanh %245 : vector<8x128xf32>
    %254 = vector.extract_strided_slice %252 {offsets = [0, 0], sizes = [8, 32], strides = [1, 1]} : vector<8x128xf32> to vector<8x32xf32>
    %255 = vector.extract_strided_slice %252 {offsets = [0, 32], sizes = [8, 32], strides = [1, 1]} : vector<8x128xf32> to vector<8x32xf32>
    %256 = vector.extract_strided_slice %253 {offsets = [0, 64], sizes = [8, 32], strides = [1, 1]} : vector<8x128xf32> to vector<8x32xf32>
    %257 = vector.extract_strided_slice %252 {offsets = [0, 96], sizes = [8, 32], strides = [1, 1]} : vector<8x128xf32> to vector<8x32xf32>
    %258 = arith.mulf %255, %215 : vector<8x32xf32>
    %259 = arith.mulf %254, %256 : vector<8x32xf32>
    %260 = arith.addf %258, %259 : vector<8x32xf32>
    %261 = math.tanh %260 : vector<8x32xf32>
    %262 = arith.mulf %257, %261 : vector<8x32xf32>
    %263 = tpu.concatenate %262, %238 in 1 : vector<8x32xf32>, vector<8x32xf32> -> vector<8x64xf32>
    %264 = arith.truncf %263 : vector<8x64xf32> to vector<8x64xbf16>
    %cst_70 = arith.constant dense<0.000000e+00> : vector<8x128xf32>
    %265 = tpu.matmul %264, %2, %cst_70 {dimension_numbers = #tpu.dot_dimension_numbers<[1], [0], [0], [1], [0, 0, 1, 1], [], []>} : vector<8x64xbf16>, vector<64x128xbf16>, vector<8x128xf32> -> vector<8x128xf32>
    %266 = arith.addf %265, %6 : vector<8x128xf32>
    %cst_71 = arith.constant 5.000000e-01 : f32
    %267 = vector.broadcast %cst_71 : f32 to vector<8x128xf32>
    %268 = arith.mulf %267, %266 : vector<8x128xf32>
    %269 = math.tanh %268 : vector<8x128xf32>
    %cst_72 = arith.constant 1.000000e+00 : f32
    %270 = vector.broadcast %cst_72 : f32 to vector<8x128xf32>
    %271 = arith.addf %269, %270 : vector<8x128xf32>
    %cst_73 = arith.constant 5.000000e-01 : f32
    %272 = vector.broadcast %cst_73 : f32 to vector<8x128xf32>
    %273 = arith.mulf %272, %271 : vector<8x128xf32>
    %274 = math.tanh %266 : vector<8x128xf32>
    %275 = vector.extract_strided_slice %273 {offsets = [0, 0], sizes = [8, 32], strides = [1, 1]} : vector<8x128xf32> to vector<8x32xf32>
    %276 = vector.extract_strided_slice %273 {offsets = [0, 32], sizes = [8, 32], strides = [1, 1]} : vector<8x128xf32> to vector<8x32xf32>
    %277 = vector.extract_strided_slice %274 {offsets = [0, 64], sizes = [8, 32], strides = [1, 1]} : vector<8x128xf32> to vector<8x32xf32>
    %278 = vector.extract_strided_slice %273 {offsets = [0, 96], sizes = [8, 32], strides = [1, 1]} : vector<8x128xf32> to vector<8x32xf32>
    %279 = arith.mulf %276, %236 : vector<8x32xf32>
    %280 = arith.mulf %275, %277 : vector<8x32xf32>
    %281 = arith.addf %279, %280 : vector<8x32xf32>
    %282 = math.tanh %281 : vector<8x32xf32>
    %283 = arith.mulf %278, %282 : vector<8x32xf32>
    %c6_i32 = arith.constant 6 : i32
    %c8_i32_74 = arith.constant 8 : i32
    %284 = arith.muli %c6_i32, %c8_i32_74 : i32
    %285 = tpu.assume_multiple %284, 8 : i32
    %286 = arith.index_cast %285 : i32 to index
    %c0_75 = arith.constant 0 : index
    %287 = vector.load %arg10[%286, %c0_75] : memref<64x128xf32, #tpu.memory_space<vmem>>, vector<8x128xf32>
    %288 = arith.truncf %262 : vector<8x32xf32> to vector<8x32xbf16>
    %cst_76 = arith.constant dense<0.000000e+00> : vector<8x128xf32>
    %289 = tpu.matmul %288, %1, %cst_76 {dimension_numbers = #tpu.dot_dimension_numbers<[1], [0], [0], [1], [0, 0, 1, 1], [], []>} : vector<8x32xbf16>, vector<32x128xbf16>, vector<8x128xf32> -> vector<8x128xf32>
    %290 = arith.addf %287, %289 : vector<8x128xf32>
    %cst_77 = arith.constant 5.000000e-01 : f32
    %291 = vector.broadcast %cst_77 : f32 to vector<8x128xf32>
    %292 = arith.mulf %291, %290 : vector<8x128xf32>
    %293 = math.tanh %292 : vector<8x128xf32>
    %cst_78 = arith.constant 1.000000e+00 : f32
    %294 = vector.broadcast %cst_78 : f32 to vector<8x128xf32>
    %295 = arith.addf %293, %294 : vector<8x128xf32>
    %cst_79 = arith.constant 5.000000e-01 : f32
    %296 = vector.broadcast %cst_79 : f32 to vector<8x128xf32>
    %297 = arith.mulf %296, %295 : vector<8x128xf32>
    %298 = math.tanh %290 : vector<8x128xf32>
    %299 = vector.extract_strided_slice %297 {offsets = [0, 0], sizes = [8, 32], strides = [1, 1]} : vector<8x128xf32> to vector<8x32xf32>
    %300 = vector.extract_strided_slice %297 {offsets = [0, 32], sizes = [8, 32], strides = [1, 1]} : vector<8x128xf32> to vector<8x32xf32>
    %301 = vector.extract_strided_slice %298 {offsets = [0, 64], sizes = [8, 32], strides = [1, 1]} : vector<8x128xf32> to vector<8x32xf32>
    %302 = vector.extract_strided_slice %297 {offsets = [0, 96], sizes = [8, 32], strides = [1, 1]} : vector<8x128xf32> to vector<8x32xf32>
    %303 = arith.mulf %300, %260 : vector<8x32xf32>
    %304 = arith.mulf %299, %301 : vector<8x32xf32>
    %305 = arith.addf %303, %304 : vector<8x32xf32>
    %306 = math.tanh %305 : vector<8x32xf32>
    %307 = arith.mulf %302, %306 : vector<8x32xf32>
    %308 = tpu.concatenate %307, %283 in 1 : vector<8x32xf32>, vector<8x32xf32> -> vector<8x64xf32>
    %309 = arith.truncf %308 : vector<8x64xf32> to vector<8x64xbf16>
    %cst_80 = arith.constant dense<0.000000e+00> : vector<8x128xf32>
    %310 = tpu.matmul %309, %2, %cst_80 {dimension_numbers = #tpu.dot_dimension_numbers<[1], [0], [0], [1], [0, 0, 1, 1], [], []>} : vector<8x64xbf16>, vector<64x128xbf16>, vector<8x128xf32> -> vector<8x128xf32>
    %311 = arith.addf %310, %6 : vector<8x128xf32>
    %cst_81 = arith.constant 5.000000e-01 : f32
    %312 = vector.broadcast %cst_81 : f32 to vector<8x128xf32>
    %313 = arith.mulf %312, %311 : vector<8x128xf32>
    %314 = math.tanh %313 : vector<8x128xf32>
    %cst_82 = arith.constant 1.000000e+00 : f32
    %315 = vector.broadcast %cst_82 : f32 to vector<8x128xf32>
    %316 = arith.addf %314, %315 : vector<8x128xf32>
    %cst_83 = arith.constant 5.000000e-01 : f32
    %317 = vector.broadcast %cst_83 : f32 to vector<8x128xf32>
    %318 = arith.mulf %317, %316 : vector<8x128xf32>
    %319 = math.tanh %311 : vector<8x128xf32>
    %320 = vector.extract_strided_slice %318 {offsets = [0, 0], sizes = [8, 32], strides = [1, 1]} : vector<8x128xf32> to vector<8x32xf32>
    %321 = vector.extract_strided_slice %318 {offsets = [0, 32], sizes = [8, 32], strides = [1, 1]} : vector<8x128xf32> to vector<8x32xf32>
    %322 = vector.extract_strided_slice %319 {offsets = [0, 64], sizes = [8, 32], strides = [1, 1]} : vector<8x128xf32> to vector<8x32xf32>
    %323 = vector.extract_strided_slice %318 {offsets = [0, 96], sizes = [8, 32], strides = [1, 1]} : vector<8x128xf32> to vector<8x32xf32>
    %324 = arith.mulf %321, %281 : vector<8x32xf32>
    %325 = arith.mulf %320, %322 : vector<8x32xf32>
    %326 = arith.addf %324, %325 : vector<8x32xf32>
    %327 = math.tanh %326 : vector<8x32xf32>
    %328 = arith.mulf %323, %327 : vector<8x32xf32>
    %c7_i32 = arith.constant 7 : i32
    %c8_i32_84 = arith.constant 8 : i32
    %329 = arith.muli %c7_i32, %c8_i32_84 : i32
    %330 = tpu.assume_multiple %329, 8 : i32
    %331 = arith.index_cast %330 : i32 to index
    %c0_85 = arith.constant 0 : index
    %332 = vector.load %arg10[%331, %c0_85] : memref<64x128xf32, #tpu.memory_space<vmem>>, vector<8x128xf32>
    %333 = arith.truncf %307 : vector<8x32xf32> to vector<8x32xbf16>
    %cst_86 = arith.constant dense<0.000000e+00> : vector<8x128xf32>
    %334 = tpu.matmul %333, %1, %cst_86 {dimension_numbers = #tpu.dot_dimension_numbers<[1], [0], [0], [1], [0, 0, 1, 1], [], []>} : vector<8x32xbf16>, vector<32x128xbf16>, vector<8x128xf32> -> vector<8x128xf32>
    %335 = arith.addf %332, %334 : vector<8x128xf32>
    %cst_87 = arith.constant 5.000000e-01 : f32
    %336 = vector.broadcast %cst_87 : f32 to vector<8x128xf32>
    %337 = arith.mulf %336, %335 : vector<8x128xf32>
    %338 = math.tanh %337 : vector<8x128xf32>
    %cst_88 = arith.constant 1.000000e+00 : f32
    %339 = vector.broadcast %cst_88 : f32 to vector<8x128xf32>
    %340 = arith.addf %338, %339 : vector<8x128xf32>
    %cst_89 = arith.constant 5.000000e-01 : f32
    %341 = vector.broadcast %cst_89 : f32 to vector<8x128xf32>
    %342 = arith.mulf %341, %340 : vector<8x128xf32>
    %343 = math.tanh %335 : vector<8x128xf32>
    %344 = vector.extract_strided_slice %342 {offsets = [0, 0], sizes = [8, 32], strides = [1, 1]} : vector<8x128xf32> to vector<8x32xf32>
    %345 = vector.extract_strided_slice %342 {offsets = [0, 32], sizes = [8, 32], strides = [1, 1]} : vector<8x128xf32> to vector<8x32xf32>
    %346 = vector.extract_strided_slice %343 {offsets = [0, 64], sizes = [8, 32], strides = [1, 1]} : vector<8x128xf32> to vector<8x32xf32>
    %347 = vector.extract_strided_slice %342 {offsets = [0, 96], sizes = [8, 32], strides = [1, 1]} : vector<8x128xf32> to vector<8x32xf32>
    %348 = arith.mulf %345, %305 : vector<8x32xf32>
    %349 = arith.mulf %344, %346 : vector<8x32xf32>
    %350 = arith.addf %348, %349 : vector<8x32xf32>
    %351 = math.tanh %350 : vector<8x32xf32>
    %352 = arith.mulf %347, %351 : vector<8x32xf32>
    %353 = tpu.concatenate %352, %328 in 1 : vector<8x32xf32>, vector<8x32xf32> -> vector<8x64xf32>
    %354 = arith.truncf %353 : vector<8x64xf32> to vector<8x64xbf16>
    %cst_90 = arith.constant dense<0.000000e+00> : vector<8x128xf32>
    %355 = tpu.matmul %354, %2, %cst_90 {dimension_numbers = #tpu.dot_dimension_numbers<[1], [0], [0], [1], [0, 0, 1, 1], [], []>} : vector<8x64xbf16>, vector<64x128xbf16>, vector<8x128xf32> -> vector<8x128xf32>
    %356 = arith.addf %355, %6 : vector<8x128xf32>
    %cst_91 = arith.constant 5.000000e-01 : f32
    %357 = vector.broadcast %cst_91 : f32 to vector<8x128xf32>
    %358 = arith.mulf %357, %356 : vector<8x128xf32>
    %359 = math.tanh %358 : vector<8x128xf32>
    %cst_92 = arith.constant 1.000000e+00 : f32
    %360 = vector.broadcast %cst_92 : f32 to vector<8x128xf32>
    %361 = arith.addf %359, %360 : vector<8x128xf32>
    %cst_93 = arith.constant 5.000000e-01 : f32
    %362 = vector.broadcast %cst_93 : f32 to vector<8x128xf32>
    %363 = arith.mulf %362, %361 : vector<8x128xf32>
    %364 = math.tanh %356 : vector<8x128xf32>
    %365 = vector.extract_strided_slice %363 {offsets = [0, 0], sizes = [8, 32], strides = [1, 1]} : vector<8x128xf32> to vector<8x32xf32>
    %366 = vector.extract_strided_slice %363 {offsets = [0, 32], sizes = [8, 32], strides = [1, 1]} : vector<8x128xf32> to vector<8x32xf32>
    %367 = vector.extract_strided_slice %364 {offsets = [0, 64], sizes = [8, 32], strides = [1, 1]} : vector<8x128xf32> to vector<8x32xf32>
    %368 = vector.extract_strided_slice %363 {offsets = [0, 96], sizes = [8, 32], strides = [1, 1]} : vector<8x128xf32> to vector<8x32xf32>
    %369 = arith.mulf %366, %326 : vector<8x32xf32>
    %370 = arith.mulf %365, %367 : vector<8x32xf32>
    %371 = arith.addf %369, %370 : vector<8x32xf32>
    %372 = math.tanh %371 : vector<8x32xf32>
    %373 = arith.mulf %368, %372 : vector<8x32xf32>
    %c8_i32_94 = arith.constant 8 : i32
    %374 = arith.truncf %373 : vector<8x32xf32> to vector<8x32xbf16>
    %c0_95 = arith.constant 0 : index
    %c0_96 = arith.constant 0 : index
    %375 = vector.load %arg7[%c0_95, %c0_96] : memref<32x4xbf16, #tpu.memory_space<vmem>>, vector<32x4xbf16>
    %cst_97 = arith.constant dense<0.000000e+00> : vector<8x4xf32>
    %376 = tpu.matmul %374, %375, %cst_97 {dimension_numbers = #tpu.dot_dimension_numbers<[1], [0], [0], [1], [0, 0, 1, 1], [], []>} : vector<8x32xbf16>, vector<32x4xbf16>, vector<8x4xf32> -> vector<8x4xf32>
    %c0_98 = arith.constant 0 : index
    %c0_99 = arith.constant 0 : index
    %377 = vector.load %arg8[%c0_98, %c0_99] : memref<1x4xf32, #tpu.memory_space<vmem>>, vector<1x4xf32>
    %378 = vector.broadcast %377 : vector<1x4xf32> to vector<8x4xf32>
    %379 = arith.addf %376, %378 : vector<8x4xf32>
    %c0_100 = arith.constant 0 : index
    %c0_101 = arith.constant 0 : index
    %380 = vector.load %arg9[%c0_100, %c0_101] : memref<8x4xf32, #tpu.memory_space<vmem>>, vector<8x4xf32>
    tpu.vector_store %arg9[%c0_100, %c0_101], %379 {strides = array<i32>} : memref<8x4xf32, #tpu.memory_space<vmem>>, vector<8x4xf32>,
    return
  }
  func.func @transform_0(%arg0: i32) -> (i32, i32, i32) {
    %c0_i32 = arith.constant 0 : i32
    %c0_i32_0 = arith.constant 0 : i32
    %c0_i32_1 = arith.constant 0 : i32
    return %arg0, %c0_i32, %c0_i32_0 : i32, i32, i32
  }
  func.func @transform_1(%arg0: i32) -> (i32, i32) {
    %c0_i32 = arith.constant 0 : i32
    %c0_i32_0 = arith.constant 0 : i32
    %c0_i32_1 = arith.constant 0 : i32
    return %c0_i32, %c0_i32_0 : i32, i32
  }
  func.func @transform_2(%arg0: i32) -> (i32, i32) {
    %c0_i32 = arith.constant 0 : i32
    %c0_i32_0 = arith.constant 0 : i32
    %c0_i32_1 = arith.constant 0 : i32
    return %c0_i32, %c0_i32_0 : i32, i32
  }
  func.func @transform_3(%arg0: i32) -> (i32, i32) {
    %c0_i32 = arith.constant 0 : i32
    %c0_i32_0 = arith.constant 0 : i32
    %c0_i32_1 = arith.constant 0 : i32
    return %c0_i32, %c0_i32_0 : i32, i32
  }
  func.func @transform_4(%arg0: i32) -> (i32, i32) {
    %c0_i32 = arith.constant 0 : i32
    %c0_i32_0 = arith.constant 0 : i32
    %c0_i32_1 = arith.constant 0 : i32
    return %c0_i32, %c0_i32_0 : i32, i32
  }
  func.func @transform_5(%arg0: i32) -> (i32, i32) {
    %c0_i32 = arith.constant 0 : i32
    %c0_i32_0 = arith.constant 0 : i32
    %c0_i32_1 = arith.constant 0 : i32
    return %c0_i32, %c0_i32_0 : i32, i32
  }
  func.func @transform_6(%arg0: i32) -> (i32, i32) {
    %c0_i32 = arith.constant 0 : i32
    %c0_i32_0 = arith.constant 0 : i32
    %c0_i32_1 = arith.constant 0 : i32
    return %c0_i32, %c0_i32_0 : i32, i32
  }
  func.func @transform_7(%arg0: i32) -> (i32, i32) {
    %c0_i32 = arith.constant 0 : i32
    %c0_i32_0 = arith.constant 0 : i32
    %c0_i32_1 = arith.constant 0 : i32
    return %c0_i32, %c0_i32_0 : i32, i32
  }
  func.func @transform_8(%arg0: i32) -> (i32, i32) {
    %c0_i32 = arith.constant 0 : i32
    %c0_i32_0 = arith.constant 0 : i32
    return %arg0, %c0_i32 : i32, i32
  }
}

</mosaic_0001>

<llo_original>
// kernel: tpu_custom_call.1
$region0: #{tpu_custom_call.1}
  #allocation0 [shape = 'u32[]', space=smem, size = 0x4, offset = 0x4, fixed_abs, tag = 'smem constant byte address 0x4 - core index']
  #allocation1 [shape = 'u32[144,128]{1,0:T(1,128)}', space=vmem, size = 0x12000, scoped, tag = 'internal scratch']
  #allocation2 [shape = 'f32[64,128]{1,0:T(8,128)}', space=vmem, size = 0x8000, scoped, tag = 'scratch operand']
  %s0 = inlined_call_operand.vmem [shape: bf16[2,64,8], index: 0, kind: input, shape index: {}]
  %s1 = inlined_call_operand.vmem [shape: bf16[8,128], index: 1, kind: input, shape index: {}]
  %s2 = inlined_call_operand.vmem [shape: bf16[32,128], index: 2, kind: input, shape index: {}]
  %s3 = inlined_call_operand.vmem [shape: f32[1,128], index: 3, kind: input, shape index: {}]
  %s4 = inlined_call_operand.vmem [shape: bf16[64,128], index: 4, kind: input, shape index: {}]
  %s5 = inlined_call_operand.vmem [shape: f32[1,128], index: 5, kind: input, shape index: {}]
  %s6 = inlined_call_operand.vmem [shape: bf16[32,4], index: 6, kind: input, shape index: {}]
  %s7 = inlined_call_operand.vmem [shape: f32[1,4], index: 7, kind: input, shape index: {}]
  %s8 = inlined_call_operand.vmem [shape: f32[16,4], index: 8, kind: output, shape index: {}]
  %s9 = sld [smem:[#allocation0]]
  $region65: #{tpu_custom_call.1} parent=0
    _
  %s11 = ssub.s32 1, %s9
  %s12 = scalar_select 0, %s11, %s9
  loop: start=0, step=1, limit=4
  $region2: #{tpu_custom_call.1} parent=0 // loop_pre_header
    _
  $region3: #{tpu_custom_call.1} parent=0 // loop_header
    %s14 = sphi 0, %s18
    %p15 = scmp.ge.s32.totalorder %s14, 4
    %s24 = sphi 0, %s26
    %s27 = sphi 0, %s24
    %s28 = sphi 0, %s27
    %s44 = sphi 0, %s28
    %s48 = sphi 0, %s48
    %s50 = sphi 0, %s48
    %s51 = sphi 0, %s50
    %s65 = sphi 0, %s51
    %s69 = sphi 0, %s69
    %s71 = sphi 0, %s69
    %s72 = sphi 0, %s71
    %s86 = sphi 0, %s72
    %s90 = sphi 0, %s90
    %s92 = sphi 0, %s90
    %s93 = sphi 0, %s92
    %s107 = sphi 0, %s93
    %s111 = sphi 0, %s111
    %s113 = sphi 0, %s111
    %s114 = sphi 0, %s113
    %s128 = sphi 0, %s114
    %s132 = sphi 0, %s132
    %s134 = sphi 0, %s132
    %s135 = sphi 0, %s134
    %s149 = sphi 0, %s135
    %s153 = sphi 0, %s153
    %s155 = sphi 0, %s153
    %s156 = sphi 0, %s155
    %s170 = sphi 0, %s156
    %s174 = sphi 0, %s174
    %s176 = sphi 0, %s174
    %s177 = sphi 0, %s176
    %s191 = sphi 0, %s177
    %s197 = sphi 0, %s199
    %s200 = sphi 0, %s197
    %s201 = sphi 0, %s200
    %s217 = sphi 0, %s201
  $region4: #{tpu_custom_call.1} parent=0 // loop_header_branch
    %17 = sbr.rel (%p15) target = $region8
  $region5: #{tpu_custom_call.1} parent=0 // loop_body
    %s19 = ssub.s32 %s14, 1
    %s20 = ssub.s32 %s14, 2
    %s21 = sadd.s32 %s14, 1
    %s22 = ssub.s32 %s14, %s21
    %p23 = scmp.eq.s32.totalorder %s22, 0
    %s25 = sadd.s32 %s24, 1
    %s26 = scalar_select %p23, %s24, %s25
    %p29 = pneg %p23
    %p30 = scmp.eq.s32.totalorder %s14, 1
    %p31 = por %p29, %p30
    %p32 = scmp.ne.s32.totalorder %s24, %s27
    %p33 = scmp.eq.s32.totalorder %s14, 0
    %p34 = por %p32, %p33
    %p35 = scmp.ne.s32.totalorder %s24, %s27
    %p36 = scmp.eq.s32.totalorder %s19, 1
    %p37 = por %p35, %p36
    %p38 = scmp.ne.s32.totalorder %s27, %s28
    %p39 = scmp.eq.s32.totalorder %s19, 0
    %p40 = por %p38, %p39
    %p41 = scmp.ne.s32.totalorder %s27, %s28
    %p42 = scmp.eq.s32.totalorder %s20, 1
    %p43 = por %p41, %p42
    %p45 = scmp.ne.s32.totalorder %s28, %s44
    %p46 = scmp.eq.s32.totalorder %s20, 0
    %p47 = por %p45, %p46
    %s49 = sadd.s32 %s48, 1
    %p52 = scmp.eq.s32.totalorder %s14, 1
    %p53 = scmp.ne.s32.totalorder %s48, %s50
    %p54 = scmp.eq.s32.totalorder %s14, 0
    %p55 = por %p53, %p54
    %p56 = scmp.ne.s32.totalorder %s48, %s50
    %p57 = scmp.eq.s32.totalorder %s19, 1
    %p58 = por %p56, %p57
    %p59 = scmp.ne.s32.totalorder %s50, %s51
    %p60 = scmp.eq.s32.totalorder %s19, 0
    %p61 = por %p59, %p60
    %p62 = scmp.ne.s32.totalorder %s50, %s51
    %p63 = scmp.eq.s32.totalorder %s20, 1
    %p64 = por %p62, %p63
    %p66 = scmp.ne.s32.totalorder %s51, %s65
    %p67 = scmp.eq.s32.totalorder %s20, 0
    %p68 = por %p66, %p67
    %s70 = sadd.s32 %s69, 1
    %p73 = scmp.eq.s32.totalorder %s14, 1
    %p74 = scmp.ne.s32.totalorder %s69, %s71
    %p75 = scmp.eq.s32.totalorder %s14, 0
    %p76 = por %p74, %p75
    %p77 = scmp.ne.s32.totalorder %s69, %s71
    %p78 = scmp.eq.s32.totalorder %s19, 1
    %p79 = por %p77, %p78
    %p80 = scmp.ne.s32.totalorder %s71, %s72
    %p81 = scmp.eq.s32.totalorder %s19, 0
    %p82 = por %p80, %p81
    %p83 = scmp.ne.s32.totalorder %s71, %s72
    %p84 = scmp.eq.s32.totalorder %s20, 1
    %p85 = por %p83, %p84
    %p87 = scmp.ne.s32.totalorder %s72, %s86
    %p88 = scmp.eq.s32.totalorder %s20, 0
    %p89 = por %p87, %p88
    %s91 = sadd.s32 %s90, 1
    %p94 = scmp.eq.s32.totalorder %s14, 1
    %p95 = scmp.ne.s32.totalorder %s90, %s92
    %p96 = scmp.eq.s32.totalorder %s14, 0
    %p97 = por %p95, %p96
    %p98 = scmp.ne.s32.totalorder %s90, %s92
    %p99 = scmp.eq.s32.totalorder %s19, 1
    %p100 = por %p98, %p99
    %p101 = scmp.ne.s32.totalorder %s92, %s93
    %p102 = scmp.eq.s32.totalorder %s19, 0
    %p103 = por %p101, %p102
    %p104 = scmp.ne.s32.totalorder %s92, %s93
    %p105 = scmp.eq.s32.totalorder %s20, 1
    %p106 = por %p104, %p105
    %p108 = scmp.ne.s32.totalorder %s93, %s107
    %p109 = scmp.eq.s32.totalorder %s20, 0
    %p110 = por %p108, %p109
    %s112 = sadd.s32 %s111, 1
    %p115 = scmp.eq.s32.totalorder %s14, 1
    %p116 = scmp.ne.s32.totalorder %s111, %s113
    %p117 = scmp.eq.s32.totalorder %s14, 0
    %p118 = por %p116, %p117
    %p119 = scmp.ne.s32.totalorder %s111, %s113
    %p120 = scmp.eq.s32.totalorder %s19, 1
    %p121 = por %p119, %p120
    %p122 = scmp.ne.s32.totalorder %s113, %s114
    %p123 = scmp.eq.s32.totalorder %s19, 0
    %p124 = por %p122, %p123
    %p125 = scmp.ne.s32.totalorder %s113, %s114
    %p126 = scmp.eq.s32.totalorder %s20, 1
    %p127 = por %p125, %p126
    %p129 = scmp.ne.s32.totalorder %s114, %s128
    %p130 = scmp.eq.s32.totalorder %s20, 0
    %p131 = por %p129, %p130
    %s133 = sadd.s32 %s132, 1
    %p136 = scmp.eq.s32.totalorder %s14, 1
    %p137 = scmp.ne.s32.totalorder %s132, %s134
    %p138 = scmp.eq.s32.totalorder %s14, 0
    %p139 = por %p137, %p138
    %p140 = scmp.ne.s32.totalorder %s132, %s134
    %p141 = scmp.eq.s32.totalorder %s19, 1
    %p142 = por %p140, %p141
    %p143 = scmp.ne.s32.totalorder %s134, %s135
    %p144 = scmp.eq.s32.totalorder %s19, 0
    %p145 = por %p143, %p144
    %p146 = scmp.ne.s32.totalorder %s134, %s135
    %p147 = scmp.eq.s32.totalorder %s20, 1
    %p148 = por %p146, %p147
    %p150 = scmp.ne.s32.totalorder %s135, %s149
    %p151 = scmp.eq.s32.totalorder %s20, 0
    %p152 = por %p150, %p151
    %s154 = sadd.s32 %s153, 1
    %p157 = scmp.eq.s32.totalorder %s14, 1
    %p158 = scmp.ne.s32.totalorder %s153, %s155
    %p159 = scmp.eq.s32.totalorder %s14, 0
    %p160 = por %p158, %p159
    %p161 = scmp.ne.s32.totalorder %s153, %s155
    %p162 = scmp.eq.s32.totalorder %s19, 1
    %p163 = por %p161, %p162
    %p164 = scmp.ne.s32.totalorder %s155, %s156
    %p165 = scmp.eq.s32.totalorder %s19, 0
    %p166 = por %p164, %p165
    %p167 = scmp.ne.s32.totalorder %s155, %s156
    %p168 = scmp.eq.s32.totalorder %s20, 1
    %p169 = por %p167, %p168
    %p171 = scmp.ne.s32.totalorder %s156, %s170
    %p172 = scmp.eq.s32.totalorder %s20, 0
    %p173 = por %p171, %p172
    %s175 = sadd.s32 %s174, 1
    %p178 = scmp.eq.s32.totalorder %s14, 1
    %p179 = scmp.ne.s32.totalorder %s174, %s176
    %p180 = scmp.eq.s32.totalorder %s14, 0
    %p181 = por %p179, %p180
    %p182 = scmp.ne.s32.totalorder %s174, %s176
    %p183 = scmp.eq.s32.totalorder %s19, 1
    %p184 = por %p182, %p183
    %p185 = scmp.ne.s32.totalorder %s176, %s177
    %p186 = scmp.eq.s32.totalorder %s19, 0
    %p187 = por %p185, %p186
    %p188 = scmp.ne.s32.totalorder %s176, %s177
    %p189 = scmp.eq.s32.totalorder %s20, 1
    %p190 = por %p188, %p189
    %p192 = scmp.ne.s32.totalorder %s177, %s191
    %p193 = scmp.eq.s32.totalorder %s20, 0
    %p194 = por %p192, %p193
    %s195 = ssub.s32 %s14, %s21
    %p196 = scmp.eq.s32.totalorder %s195, 0
    %s198 = sadd.s32 %s197, 1
    %s199 = scalar_select %p196, %s197, %s198
    %p202 = pneg %p196
    %p203 = scmp.eq.s32.totalorder %s14, 1
    %p204 = por %p202, %p203
    %p205 = scmp.ne.s32.totalorder %s197, %s200
    %p206 = scmp.eq.s32.totalorder %s14, 0
    %p207 = por %p205, %p206
    %p208 = scmp.ne.s32.totalorder %s197, %s200
    %p209 = scmp.eq.s32.totalorder %s19, 1
    %p210 = por %p208, %p209
    %p211 = scmp.ne.s32.totalorder %s200, %s201
    %p212 = scmp.eq.s32.totalorder %s19, 0
    %p213 = por %p211, %p212
    %p214 = scmp.ne.s32.totalorder %s200, %s201
    %p215 = scmp.eq.s32.totalorder %s20, 1
    %p216 = por %p214, %p215
    %p218 = scmp.ne.s32.totalorder %s201, %s217
    %p219 = scmp.eq.s32.totalorder %s20, 0
    %p220 = por %p218, %p219
    %p221 = scmp.le.s32.totalorder 1, %s14
    %p222 = scmp.lt.s32.totalorder %s14, 3
    %p223 = pnand %p221, %p222
    %p224 = pneg %p223
    // Predicated region
    $region9: #{tpu_custom_call.1} parent=5 // pred_check
      _
    $region10: #{tpu_custom_call.1} parent=5 // pred_check_branch
      %226 = sbr.rel (%p223) target = $region12
    $region11: #{tpu_custom_call.1} parent=5 // pred_region
      %s227 = ssub.s32 %s14, 1
      // Predicated region
      $region13: #{tpu_custom_call.1} parent=11 // pred_check
        %p228 = pneg %p61
      $region14: #{tpu_custom_call.1} parent=11 // pred_check_branch
        %230 = sbr.rel (%p228) target = $region16
      $region15: #{tpu_custom_call.1} parent=11 // pred_region
        _
      $region16: #{tpu_custom_call.1} parent=11 // pred_fallthru
        _
      // Predicated region
      $region17: #{tpu_custom_call.1} parent=11 // pred_check
        %p231 = pneg %p82
      $region18: #{tpu_custom_call.1} parent=11 // pred_check_branch
        %233 = sbr.rel (%p231) target = $region20
      $region19: #{tpu_custom_call.1} parent=11 // pred_region
        _
      $region20: #{tpu_custom_call.1} parent=11 // pred_fallthru
        _
      // Predicated region
      $region21: #{tpu_custom_call.1} parent=11 // pred_check
        %p234 = pneg %p103
      $region22: #{tpu_custom_call.1} parent=11 // pred_check_branch
        %236 = sbr.rel (%p234) target = $region24
      $region23: #{tpu_custom_call.1} parent=11 // pred_region
        _
      $region24: #{tpu_custom_call.1} parent=11 // pred_fallthru
        _
      // Predicated region
      $region25: #{tpu_custom_call.1} parent=11 // pred_check
        %p237 = pneg %p124
      $region26: #{tpu_custom_call.1} parent=11 // pred_check_branch
        %239 = sbr.rel (%p237) target = $region28
      $region27: #{tpu_custom_call.1} parent=11 // pred_region
        _
      $region28: #{tpu_custom_call.1} parent=11 // pred_fallthru
        _
      // Predicated region
      $region29: #{tpu_custom_call.1} parent=11 // pred_check
        %p240 = pneg %p145
      $region30: #{tpu_custom_call.1} parent=11 // pred_check_branch
        %242 = sbr.rel (%p240) target = $region32
      $region31: #{tpu_custom_call.1} parent=11 // pred_region
        _
      $region32: #{tpu_custom_call.1} parent=11 // pred_fallthru
        _
      // Predicated region
      $region33: #{tpu_custom_call.1} parent=11 // pred_check
        %p243 = pneg %p166
      $region34: #{tpu_custom_call.1} parent=11 // pred_check_branch
        %245 = sbr.rel (%p243) target = $region36
      $region35: #{tpu_custom_call.1} parent=11 // pred_region
        _
      $region36: #{tpu_custom_call.1} parent=11 // pred_fallthru
        _
      // Predicated region
      $region37: #{tpu_custom_call.1} parent=11 // pred_check
        %p246 = pneg %p187
      $region38: #{tpu_custom_call.1} parent=11 // pred_check_branch
        %248 = sbr.rel (%p246) target = $region40
      $region39: #{tpu_custom_call.1} parent=11 // pred_region
        _
      $region40: #{tpu_custom_call.1} parent=11 // pred_fallthru
        _
    $region12: #{tpu_custom_call.1} parent=5 // pred_fallthru
      _
    %p249 = scmp.lt.s32.totalorder %s14, 2
    // Predicated region
    $region41: #{tpu_custom_call.1} parent=5 // pred_check
      %p250 = pneg %p249
    $region42: #{tpu_custom_call.1} parent=5 // pred_check_branch
      %252 = sbr.rel (%p250) target = $region44
    $region43: #{tpu_custom_call.1} parent=5 // pred_region
      // Predicated region
      $region45: #{tpu_custom_call.1} parent=43 // pred_check
        %p253 = pneg %p34
      $region46: #{tpu_custom_call.1} parent=43 // pred_check_branch
        %255 = sbr.rel (%p253) target = $region48
      $region47: #{tpu_custom_call.1} parent=43 // pred_region
        %p256 = scmp.lt.s32.totalorder %s14, 1
        %s257 = scalar_select %p256, %s14, 1
        %s258 = smul.addr %s257, 8
        %s259 = smul.addr %s258, 4
        %s260 = scalar_lea.vmem %s0, %s259
      $region48: #{tpu_custom_call.1} parent=43 // pred_fallthru
        _
    $region44: #{tpu_custom_call.1} parent=5 // pred_fallthru
      _
    %p261 = scmp.le.s32.totalorder 1, %s14
    %p262 = scmp.lt.s32.totalorder %s14, 3
    %p263 = pnand %p261, %p262
    %p264 = pneg %p263
    // Predicated region
    $region49: #{tpu_custom_call.1} parent=5 // pred_check
      _
    $region50: #{tpu_custom_call.1} parent=5 // pred_check_branch
      %266 = sbr.rel (%p263) target = $region52
    $region51: #{tpu_custom_call.1} parent=5 // pred_region
      %s267 = ssub.s32 %s14, 1
      %p268 = scmp.lt.s32.totalorder %s19, 1
      %s269 = scalar_select %p268, %s19, 1
      %s270 = smul.addr %s269, 8
      %s271 = smul.addr %s270, 4
      %s272 = scalar_lea.vmem %s0, %s271
      %p273 = pneg %p40
      %p274 = pneg %p37
      %p275 = pneg %p61
      %p276 = pneg %p58
      %p277 = pneg %p82
      %p278 = pneg %p79
      %p279 = pneg %p103
      %p280 = pneg %p100
      %p281 = pneg %p124
      %p282 = pneg %p121
      %p283 = pneg %p145
      %p284 = pneg %p142
      %p285 = pneg %p166
      %p286 = pneg %p163
      %p287 = pneg %p187
      %p288 = pneg %p184
      %p289 = pneg %p213
      %p290 = pneg %p210
      %p291 = scmp.lt.s32.totalorder %s19, 1
      %s292 = scalar_select %p291, %s19, 1
      %s293 = smul.addr %s292, 8
      %s294 = scalar_lea.vmem %s8, %s293
      %p295 = scmp.lt.s32.totalorder %s19, 1
      %s296 = scalar_select %p295, %s19, 1
      %s297 = smul.addr %s296, 8
      %s298 = smul.addr %s297, 4
      %s299 = scalar_lea.vmem %s0, %s298
      %p300 = scmp.lt.s32.totalorder %s19, 1
      %s301 = scalar_select %p300, %s19, 1
      %s302 = smul.addr %s301, 8
      %s303 = scalar_lea.vmem %s8, %s302
      %v305 = vld [vmem:[%s1] sm:$0xf]
      %v306 = vld [vmem:[%s2] sm:$0xf]
      %v307 = vld [vmem:[%s2 + $0x4] sm:$0xf]
      %v308 = vld [vmem:[%s2 + $0x8] sm:$0xf]
      %v309 = vld [vmem:[%s2 + $0xc] sm:$0xf]
      %v310 = vld [vmem:[%s4] sm:$0xf]
      %v311 = vld [vmem:[%s4 + $0x4] sm:$0xf]
      %v312 = vld [vmem:[%s4 + $0x8] sm:$0xf]
      %v313 = vld [vmem:[%s4 + $0xc] sm:$0xf]
      %v314 = vld [vmem:[%s4 + $0x10] sm:$0xf]
      %v315 = vld [vmem:[%s4 + $0x14] sm:$0xf]
      %v316 = vld [vmem:[%s4 + $0x18] sm:$0xf]
      %v317 = vld [vmem:[%s4 + $0x1c] sm:$0xf]
      %v318 = vld [vmem:[%s3] sm:$0x1]
      %v319 = vld [vmem:[%s5] sm:$0x1]
      %v321 = vlaneseq
      %v322 = vshrl.u32 %v321, 7
      %v323 = vsub.s32 0, %v322
      %v324 = vrot.slane %v319, %v323
      %v326 = vld [vmem:[%s299] sm:$0xf]
      %v327 = vld [vmem:[%s299 + $0x4] sm:$0xf]
      %v328 = vld [vmem:[%s299 + $0x8] sm:$0xf]
      %v329 = vld [vmem:[%s299 + $0xc] sm:$0xf]
      %v330 = vld [vmem:[%s299 + $0x10] sm:$0xf]
      %v331 = vld [vmem:[%s299 + $0x14] sm:$0xf]
      %v332 = vld [vmem:[%s299 + $0x18] sm:$0xf]
      %v333 = vld [vmem:[%s299 + $0x1c] sm:$0xf]
      %v335 = vlaneseq
      %v336 = vshrl.u32 %v335, 7
      %v337 = vsub.s32 0, %v336
      %v338 = vrot.slane %v318, %v337
      %v348 = vunpack.c.l.b16 %v326
      %v349 = vunpack.c.l.b16 %v327
      %v350 = vunpack.c.l.b16 %v328
      %v351 = vunpack.c.l.b16 %v329
      %v352 = vunpack.c.l.b16 %v330
      %v353 = vunpack.c.l.b16 %v331
      %v354 = vunpack.c.l.b16 %v332
      %v355 = vunpack.c.l.b16 %v333
      %v356 = vpack.c.b16 %v349, %v348
      %v357 = vpack.c.b16 %v351, %v350
      %v358 = vpack.c.b16 %v353, %v352
      %v359 = vpack.c.b16 %v355, %v354
      %vm360 = vcmask 64512
      %v362 = vsel %vm360, %v356, 0
      %v365 = vsel %vm360, %v357, 0
      %v368 = vsel %vm360, %v358, 0
      %v371 = vsel %vm360, %v359, 0
      %vm373 = vcmask 1043456
      %v375 = vsel %vm373, %v305, 0
      %377 = vmatprep.subr.bf16.mxu0 0
      %378 = vmatpush1.bf16.msra.mxu0 %v375
      %379 = vmatprep.subr.bf16.mxu0 0
      %380 = vmatpush1.bf16.msra.mxu0 0
      %381 = vmatprep.subr.bf16.mxu0 0
      %382 = vmatpush1.bf16.msra.mxu0 0
      %383 = vmatprep.subr.bf16.mxu0 0
      %384 = vmatpush1.bf16.msra.mxu0 0
      %385 = vmatprep.subr.bf16.mxu0 0
      %386 = vmatpush1.bf16.msra.mxu0 0
      %387 = vmatprep.subr.bf16.mxu0 0
      %388 = vmatpush1.bf16.msra.mxu0 0
      %389 = vmatprep.subr.bf16.mxu0 0
      %390 = vmatpush1.bf16.msra.mxu0 0
      %391 = vmatprep.subr.bf16.mxu0 0
      %392 = vmatpush1.bf16.msra.mxu0 0
      %393 = vmatprep.subr.bf16.mxu0 0
      %394 = vmatpush1.bf16.msra.mxu0 0
      %395 = vmatprep.subr.bf16.mxu0 0
      %396 = vmatpush1.bf16.msra.mxu0 0
      %397 = vmatprep.subr.bf16.mxu0 0
      %398 = vmatpush1.bf16.msra.mxu0 0
      %399 = vmatprep.subr.bf16.mxu0 0
      %400 = vmatpush1.bf16.msra.mxu0 0
      %401 = vmatprep.subr.bf16.mxu0 0
      %402 = vmatpush1.bf16.msra.mxu0 0
      %403 = vmatprep.subr.bf16.mxu0 0
      %404 = vmatpush1.bf16.msra.mxu0 0
      %405 = vmatprep.subr.bf16.mxu0 0
      %406 = vmatpush1.bf16.msra.mxu0 0
      %407 = vmatprep.subr.bf16.mxu0 0
      %408 = vmatpush1.bf16.msra.mxu0 0
      %409 = vmatprep.mubr.bf16.mxu0 0
      %410 = vmatmul.mubr.bf16.gmra.mrb[0].mxu0 %v362
      %v411 = vpop.f32.mrb[0].mxu0
      %v412 = vadd.f32 %v338, %v411
      %v413 = vpop.f32.mrb[0].mxu0
      %v414 = vpop.f32.mrb[0].mxu0
      %v415 = vadd.f32 %v338, %v414
      %v416 = vpop.f32.mrb[0].mxu0
      %417 = vmatprep.mubr.bf16.mxu0 0
      %418 = vmatmul.mubr.bf16.gmra.mrb[0].mxu0 %v365
      %v419 = vpop.f32.mrb[0].mxu0
      %v420 = vadd.f32 %v338, %v419
      %v421 = vpop.f32.mrb[0].mxu0
      %v422 = vpop.f32.mrb[0].mxu0
      %v423 = vadd.f32 %v338, %v422
      %v424 = vpop.f32.mrb[0].mxu0
      %425 = vmatprep.mubr.bf16.mxu0 0
      %426 = vmatmul.mubr.bf16.gmra.mrb[0].mxu0 %v368
      %v427 = vpop.f32.mrb[0].mxu0
      %v428 = vadd.f32 %v338, %v427
      %v429 = vpop.f32.mrb[0].mxu0
      %v430 = vpop.f32.mrb[0].mxu0
      %v431 = vadd.f32 %v338, %v430
      %v432 = vpop.f32.mrb[0].mxu0
      %433 = vmatprep.mubr.bf16.mxu0 0
      %434 = vmatmul.mubr.bf16.gmra.mrb[0].mxu0 %v371
      %v435 = vpop.f32.mrb[0].mxu0
      %v436 = vadd.f32 %v338, %v435
      %v437 = vpop.f32.mrb[0].mxu0
      %v438 = vpop.f32.mrb[0].mxu0
      %v439 = vadd.f32 %v338, %v438
      %v440 = vpop.f32.mrb[0].mxu0
      %441 = vdwg.mxu0
      %442 = vst [vmem:[#allocation2] sm:$0xff] %v412
      %443 = vst [vmem:[#allocation2 + $0x8] sm:$0xff] %v415
      %444 = vst [vmem:[#allocation2 + $0x10] sm:$0xff] %v420
      %445 = vst [vmem:[#allocation2 + $0x18] sm:$0xff] %v423
      %446 = vst [vmem:[#allocation2 + $0x20] sm:$0xff] %v428
      %447 = vst [vmem:[#allocation2 + $0x28] sm:$0xff] %v431
      %448 = vst [vmem:[#allocation2 + $0x30] sm:$0xff] %v436
      %449 = vst [vmem:[#allocation2 + $0x38] sm:$0xff] %v439
      %v450 = vld [vmem:[#allocation2] sm:$0xff]
      %v455 = vunpack.c.l.b16 %v306
      %v456 = vunpack.c.l.b16 %v307
      %v457 = vunpack.c.l.b16 %v308
      %v458 = vunpack.c.l.b16 %v309
      %v459 = vpack.c.b16 %v456, %v455
      %v460 = vpack.c.b16 %v458, %v457
      %vm463 = vcmask 261120
      %v465 = vsel %vm463, 0, 0
      %467 = vmatprep.subr.bf16.mxu0 0
      %468 = vmatpush1.bf16.msra.mxu0 %v459
      %469 = vmatprep.subr.bf16.mxu0 0
      %470 = vmatpush1.bf16.msra.mxu0 %v460
      %471 = vmatprep.subr.bf16.mxu0 0
      %472 = vmatpush1.bf16.msra.mxu0 0
      %473 = vmatprep.subr.bf16.mxu0 0
      %474 = vmatpush1.bf16.msra.mxu0 0
      %475 = vmatprep.subr.bf16.mxu0 0
      %476 = vmatpush1.bf16.msra.mxu0 0
      %477 = vmatprep.subr.bf16.mxu0 0
      %478 = vmatpush1.bf16.msra.mxu0 0
      %479 = vmatprep.subr.bf16.mxu0 0
      %480 = vmatpush1.bf16.msra.mxu0 0
      %481 = vmatprep.subr.bf16.mxu0 0
      %482 = vmatpush1.bf16.msra.mxu0 0
      %483 = vmatprep.subr.bf16.mxu0 0
      %484 = vmatpush1.bf16.msra.mxu0 0
      %485 = vmatprep.subr.bf16.mxu0 0
      %486 = vmatpush1.bf16.msra.mxu0 0
      %487 = vmatprep.subr.bf16.mxu0 0
      %488 = vmatpush1.bf16.msra.mxu0 0
      %489 = vmatprep.subr.bf16.mxu0 0
      %490 = vmatpush1.bf16.msra.mxu0 0
      %491 = vmatprep.subr.bf16.mxu0 0
      %492 = vmatpush1.bf16.msra.mxu0 0
      %493 = vmatprep.subr.bf16.mxu0 0
      %494 = vmatpush1.bf16.msra.mxu0 0
      %495 = vmatprep.subr.bf16.mxu0 0
      %496 = vmatpush1.bf16.msra.mxu0 0
      %497 = vmatprep.subr.bf16.mxu0 0
      %498 = vmatpush1.bf16.msra.mxu0 0
      %499 = vmatprep.mubr.bf16.mxu0 0
      %500 = vmatmul.mubr.bf16.gmra.mrb[0].mxu0 %v465
      %v501 = vpop.f32.mrb[0].mxu0
      %v502 = vadd.f32 0.0, %v501
      %v503 = vpop.f32.mrb[0].mxu0
      %v504 = vpop.f32.mrb[0].mxu0
      %v505 = vpop.f32.mrb[0].mxu0
      %506 = vdwg.mxu0
      %v507 = vadd.f32 %v450, %v502
      %v508 = vmul.f32 %v507, 0.5
      %v509 = vtanh.pop %v508
      %v510 = vadd.f32 %v509, 1.0
      %v511 = vmul.f32 %v510, 0.5
      %v512 = vtanh.pop %v507
      %v513 = vmul.f32 %v511, 0.0
      %515 = vrot.lane.b32.xlu0 %v512, 64
      %v516 = vpop.permute.xlu0 %515
      %v518 = vmul.f32 %v511, %v516
      %520 = vrot.lane.b32.xlu0 %v518, 32
      %v521 = vpop.permute.xlu0 %520
      %v523 = vadd.f32 %v513, %v521
      %v524 = vtanh.pop %v523
      %526 = vrot.lane.b32.xlu0 %v524, 64
      %v527 = vpop.permute.xlu0 %526
      %v529 = vmul.f32 %v511, %v527
      %531 = vrot.lane.b32.xlu0 %v529, 32
      %v532 = vpop.permute.xlu0 %531
      %v534 = vsel %vm463, %v532, 0.0
      %v535 = vpack.c.bf16 %v534, %v534
      %v544 = vunpack.c.l.b16 %v310
      %v545 = vunpack.c.l.b16 %v311
      %v546 = vunpack.c.l.b16 %v312
      %v547 = vunpack.c.l.b16 %v313
      %v548 = vunpack.c.l.b16 %v314
      %v549 = vunpack.c.l.b16 %v315
      %v550 = vunpack.c.l.b16 %v316
      %v551 = vunpack.c.l.b16 %v317
      %v552 = vpack.c.b16 %v545, %v544
      %v553 = vpack.c.b16 %v547, %v546
      %v554 = vpack.c.b16 %v549, %v548
      %v555 = vpack.c.b16 %v551, %v550
      %vm560 = vcmask 523264
      %v562 = vsel %vm560, %v535, 0
      %564 = vmatprep.subr.bf16.mxu0 0
      %565 = vmatpush1.bf16.msra.mxu0 %v552
      %566 = vmatprep.subr.bf16.mxu0 0
      %567 = vmatpush1.bf16.msra.mxu0 %v553
      %568 = vmatprep.subr.bf16.mxu0 0
      %569 = vmatpush1.bf16.msra.mxu0 %v554
      %570 = vmatprep.subr.bf16.mxu0 0
      %571 = vmatpush1.bf16.msra.mxu0 %v555
      %572 = vmatprep.subr.bf16.mxu0 0
      %573 = vmatpush1.bf16.msra.mxu0 0
      %574 = vmatprep.subr.bf16.mxu0 0
      %575 = vmatpush1.bf16.msra.mxu0 0
      %576 = vmatprep.subr.bf16.mxu0 0
      %577 = vmatpush1.bf16.msra.mxu0 0
      %578 = vmatprep.subr.bf16.mxu0 0
      %579 = vmatpush1.bf16.msra.mxu0 0
      %580 = vmatprep.subr.bf16.mxu0 0
      %581 = vmatpush1.bf16.msra.mxu0 0
      %582 = vmatprep.subr.bf16.mxu0 0
      %583 = vmatpush1.bf16.msra.mxu0 0
      %584 = vmatprep.subr.bf16.mxu0 0
      %585 = vmatpush1.bf16.msra.mxu0 0
      %586 = vmatprep.subr.bf16.mxu0 0
      %587 = vmatpush1.bf16.msra.mxu0 0
      %588 = vmatprep.subr.bf16.mxu0 0
      %589 = vmatpush1.bf16.msra.mxu0 0
      %590 = vmatprep.subr.bf16.mxu0 0
      %591 = vmatpush1.bf16.msra.mxu0 0
      %592 = vmatprep.subr.bf16.mxu0 0
      %593 = vmatpush1.bf16.msra.mxu0 0
      %594 = vmatprep.subr.bf16.mxu0 0
      %595 = vmatpush1.bf16.msra.mxu0 0
      %596 = vmatprep.mubr.bf16.mxu0 0
      %597 = vmatmul.mubr.bf16.gmra.mrb[0].mxu0 %v562
      %v598 = vpop.f32.mrb[0].mxu0
      %v599 = vadd.f32 %v324, %v598
      %v600 = vpop.f32.mrb[0].mxu0
      %v601 = vpop.f32.mrb[0].mxu0
      %v602 = vpop.f32.mrb[0].mxu0
      %603 = vdwg.mxu0
      %v604 = vmul.f32 %v599, 0.5
      %v605 = vtanh.pop %v604
      %v606 = vadd.f32 %v605, 1.0
      %v607 = vmul.f32 %v606, 0.5
      %v608 = vtanh.pop %v599
      %v609 = vmul.f32 %v607, 0.0
      %611 = vrot.lane.b32.xlu0 %v608, 64
      %v612 = vpop.permute.xlu0 %611
      %v614 = vmul.f32 %v607, %v612
      %616 = vrot.lane.b32.xlu0 %v614, 32
      %v617 = vpop.permute.xlu0 %616
      %v619 = vadd.f32 %v609, %v617
      %v620 = vtanh.pop %v619
      %622 = vrot.lane.b32.xlu0 %v620, 64
      %v623 = vpop.permute.xlu0 %622
      %v625 = vmul.f32 %v607, %v623
      %s626 = scalar_lea.vmem [#allocation2], 8
      %v627 = vld [vmem:[%s626] sm:$0xff]
      %v628 = vpack.c.bf16 %v529, %v529
      %630 = vrot.lane.b32.xlu0 %v628, 32
      %v631 = vpop.permute.xlu0 %630
      %v633 = vsel %vm463, %v631, 0
      %635 = vmatprep.subr.bf16.mxu0 0
      %636 = vmatpush1.bf16.msra.mxu0 %v459
      %637 = vmatprep.subr.bf16.mxu0 0
      %638 = vmatpush1.bf16.msra.mxu0 %v460
      %639 = vmatprep.subr.bf16.mxu0 0
      %640 = vmatpush1.bf16.msra.mxu0 0
      %641 = vmatprep.subr.bf16.mxu0 0
      %642 = vmatpush1.bf16.msra.mxu0 0
      %643 = vmatprep.subr.bf16.mxu0 0
      %644 = vmatpush1.bf16.msra.mxu0 0
      %645 = vmatprep.subr.bf16.mxu0 0
      %646 = vmatpush1.bf16.msra.mxu0 0
      %647 = vmatprep.subr.bf16.mxu0 0
      %648 = vmatpush1.bf16.msra.mxu0 0
      %649 = vmatprep.subr.bf16.mxu0 0
      %650 = vmatpush1.bf16.msra.mxu0 0
      %651 = vmatprep.subr.bf16.mxu0 0
      %652 = vmatpush1.bf16.msra.mxu0 0
      %653 = vmatprep.subr.bf16.mxu0 0
      %654 = vmatpush1.bf16.msra.mxu0 0
      %655 = vmatprep.subr.bf16.mxu0 0
      %656 = vmatpush1.bf16.msra.mxu0 0
      %657 = vmatprep.subr.bf16.mxu0 0
      %658 = vmatpush1.bf16.msra.mxu0 0
      %659 = vmatprep.subr.bf16.mxu0 0
      %660 = vmatpush1.bf16.msra.mxu0 0
      %661 = vmatprep.subr.bf16.mxu0 0
      %662 = vmatpush1.bf16.msra.mxu0 0
      %663 = vmatprep.subr.bf16.mxu0 0
      %664 = vmatpush1.bf16.msra.mxu0 0
      %665 = vmatprep.subr.bf16.mxu0 0
      %666 = vmatpush1.bf16.msra.mxu0 0
      %667 = vmatprep.mubr.bf16.mxu0 0
      %668 = vmatmul.mubr.bf16.gmra.mrb[0].mxu0 %v633
      %v669 = vpop.f32.mrb[0].mxu0
      %v670 = vadd.f32 0.0, %v669
      %v671 = vpop.f32.mrb[0].mxu0
      %v672 = vpop.f32.mrb[0].mxu0
      %v673 = vpop.f32.mrb[0].mxu0
      %674 = vdwg.mxu0
      %v675 = vadd.f32 %v627, %v670
      %v676 = vmul.f32 %v675, 0.5
      %v677 = vtanh.pop %v676
      %v678 = vadd.f32 %v677, 1.0
      %v679 = vmul.f32 %v678, 0.5
      %v680 = vtanh.pop %v675
      %v681 = vmul.f32 %v679, %v523
      %683 = vrot.lane.b32.xlu0 %v680, 64
      %v684 = vpop.permute.xlu0 %683
      %v686 = vmul.f32 %v679, %v684
      %688 = vrot.lane.b32.xlu0 %v686, 32
      %v689 = vpop.permute.xlu0 %688
      %v691 = vadd.f32 %v681, %v689
      %v692 = vtanh.pop %v691
      %694 = vrot.lane.b32.xlu0 %v692, 64
      %v695 = vpop.permute.xlu0 %694
      %v697 = vmul.f32 %v679, %v695
      %699 = vrot.lane.b32.xlu0 %v697, 32
      %v700 = vpop.permute.xlu0 %699
      %703 = vrot.lane.b32.xlu0 %v625, 64
      %v704 = vpop.permute.xlu0 %703
      %v706 = vsel %vm463, %v700, %v704
      %v707 = vpack.c.bf16 %v706, %v706
      %v709 = vsel %vm560, %v707, 0
      %711 = vmatprep.subr.bf16.mxu0 0
      %712 = vmatpush1.bf16.msra.mxu0 %v552
      %713 = vmatprep.subr.bf16.mxu0 0
      %714 = vmatpush1.bf16.msra.mxu0 %v553
      %715 = vmatprep.subr.bf16.mxu0 0
      %716 = vmatpush1.bf16.msra.mxu0 %v554
      %717 = vmatprep.subr.bf16.mxu0 0
      %718 = vmatpush1.bf16.msra.mxu0 %v555
      %719 = vmatprep.subr.bf16.mxu0 0
      %720 = vmatpush1.bf16.msra.mxu0 0
      %721 = vmatprep.subr.bf16.mxu0 0
      %722 = vmatpush1.bf16.msra.mxu0 0
      %723 = vmatprep.subr.bf16.mxu0 0
      %724 = vmatpush1.bf16.msra.mxu0 0
      %725 = vmatprep.subr.bf16.mxu0 0
      %726 = vmatpush1.bf16.msra.mxu0 0
      %727 = vmatprep.subr.bf16.mxu0 0
      %728 = vmatpush1.bf16.msra.mxu0 0
      %729 = vmatprep.subr.bf16.mxu0 0
      %730 = vmatpush1.bf16.msra.mxu0 0
      %731 = vmatprep.subr.bf16.mxu0 0
      %732 = vmatpush1.bf16.msra.mxu0 0
      %733 = vmatprep.subr.bf16.mxu0 0
      %734 = vmatpush1.bf16.msra.mxu0 0
      %735 = vmatprep.subr.bf16.mxu0 0
      %736 = vmatpush1.bf16.msra.mxu0 0
      %737 = vmatprep.subr.bf16.mxu0 0
      %738 = vmatpush1.bf16.msra.mxu0 0
      %739 = vmatprep.subr.bf16.mxu0 0
      %740 = vmatpush1.bf16.msra.mxu0 0
      %741 = vmatprep.subr.bf16.mxu0 0
      %742 = vmatpush1.bf16.msra.mxu0 0
      %743 = vmatprep.mubr.bf16.mxu0 0
      %744 = vmatmul.mubr.bf16.gmra.mrb[0].mxu0 %v709
      %v745 = vpop.f32.mrb[0].mxu0
      %v746 = vadd.f32 %v324, %v745
      %v747 = vpop.f32.mrb[0].mxu0
      %v748 = vpop.f32.mrb[0].mxu0
      %v749 = vpop.f32.mrb[0].mxu0
      %750 = vdwg.mxu0
      %v751 = vmul.f32 %v746, 0.5
      %v752 = vtanh.pop %v751
      %v753 = vadd.f32 %v752, 1.0
      %v754 = vmul.f32 %v753, 0.5
      %v755 = vtanh.pop %v746
      %v756 = vmul.f32 %v754, %v619
      %758 = vrot.lane.b32.xlu0 %v755, 64
      %v759 = vpop.permute.xlu0 %758
      %v761 = vmul.f32 %v754, %v759
      %763 = vrot.lane.b32.xlu0 %v761, 32
      %v764 = vpop.permute.xlu0 %763
      %v766 = vadd.f32 %v756, %v764
      %v767 = vtanh.pop %v766
      %769 = vrot.lane.b32.xlu0 %v767, 64
      %v770 = vpop.permute.xlu0 %769
      %v772 = vmul.f32 %v754, %v770
      %s773 = scalar_lea.vmem [#allocation2], 16
      %v774 = vld [vmem:[%s773] sm:$0xff]
      %v775 = vpack.c.bf16 %v697, %v697
      %777 = vrot.lane.b32.xlu0 %v775, 32
      %v778 = vpop.permute.xlu0 %777
      %v780 = vsel %vm463, %v778, 0
      %782 = vmatprep.subr.bf16.mxu0 0
      %783 = vmatpush1.bf16.msra.mxu0 %v459
      %784 = vmatprep.subr.bf16.mxu0 0
      %785 = vmatpush1.bf16.msra.mxu0 %v460
      %786 = vmatprep.subr.bf16.mxu0 0
      %787 = vmatpush1.bf16.msra.mxu0 0
      %788 = vmatprep.subr.bf16.mxu0 0
      %789 = vmatpush1.bf16.msra.mxu0 0
      %790 = vmatprep.subr.bf16.mxu0 0
      %791 = vmatpush1.bf16.msra.mxu0 0
      %792 = vmatprep.subr.bf16.mxu0 0
      %793 = vmatpush1.bf16.msra.mxu0 0
      %794 = vmatprep.subr.bf16.mxu0 0
      %795 = vmatpush1.bf16.msra.mxu0 0
      %796 = vmatprep.subr.bf16.mxu0 0
      %797 = vmatpush1.bf16.msra.mxu0 0
      %798 = vmatprep.subr.bf16.mxu0 0
      %799 = vmatpush1.bf16.msra.mxu0 0
      %800 = vmatprep.subr.bf16.mxu0 0
      %801 = vmatpush1.bf16.msra.mxu0 0
      %802 = vmatprep.subr.bf16.mxu0 0
      %803 = vmatpush1.bf16.msra.mxu0 0
      %804 = vmatprep.subr.bf16.mxu0 0
      %805 = vmatpush1.bf16.msra.mxu0 0
      %806 = vmatprep.subr.bf16.mxu0 0
      %807 = vmatpush1.bf16.msra.mxu0 0
      %808 = vmatprep.subr.bf16.mxu0 0
      %809 = vmatpush1.bf16.msra.mxu0 0
      %810 = vmatprep.subr.bf16.mxu0 0
      %811 = vmatpush1.bf16.msra.mxu0 0
      %812 = vmatprep.subr.bf16.mxu0 0
      %813 = vmatpush1.bf16.msra.mxu0 0
      %814 = vmatprep.mubr.bf16.mxu0 0
      %815 = vmatmul.mubr.bf16.gmra.mrb[0].mxu0 %v780
      %v816 = vpop.f32.mrb[0].mxu0
      %v817 = vadd.f32 0.0, %v816
      %v818 = vpop.f32.mrb[0].mxu0
      %v819 = vpop.f32.mrb[0].mxu0
      %v820 = vpop.f32.mrb[0].mxu0
      %821 = vdwg.mxu0
      %v822 = vadd.f32 %v774, %v817
      %v823 = vmul.f32 %v822, 0.5
      %v824 = vtanh.pop %v823
      %v825 = vadd.f32 %v824, 1.0
      %v826 = vmul.f32 %v825, 0.5
      %v827 = vtanh.pop %v822
      %v828 = vmul.f32 %v826, %v691
      %830 = vrot.lane.b32.xlu0 %v827, 64
      %v831 = vpop.permute.xlu0 %830
      %v833 = vmul.f32 %v826, %v831
      %835 = vrot.lane.b32.xlu0 %v833, 32
      %v836 = vpop.permute.xlu0 %835
      %v838 = vadd.f32 %v828, %v836
      %v839 = vtanh.pop %v838
      %841 = vrot.lane.b32.xlu0 %v839, 64
      %v842 = vpop.permute.xlu0 %841
      %v844 = vmul.f32 %v826, %v842
      %846 = vrot.lane.b32.xlu0 %v844, 32
      %v847 = vpop.permute.xlu0 %846
      %850 = vrot.lane.b32.xlu0 %v772, 64
      %v851 = vpop.permute.xlu0 %850
      %v853 = vsel %vm463, %v847, %v851
      %v854 = vpack.c.bf16 %v853, %v853
      %v856 = vsel %vm560, %v854, 0
      %858 = vmatprep.subr.bf16.mxu0 0
      %859 = vmatpush1.bf16.msra.mxu0 %v552
      %860 = vmatprep.subr.bf16.mxu0 0
      %861 = vmatpush1.bf16.msra.mxu0 %v553
      %862 = vmatprep.subr.bf16.mxu0 0
      %863 = vmatpush1.bf16.msra.mxu0 %v554
      %864 = vmatprep.subr.bf16.mxu0 0
      %865 = vmatpush1.bf16.msra.mxu0 %v555
      %866 = vmatprep.subr.bf16.mxu0 0
      %867 = vmatpush1.bf16.msra.mxu0 0
      %868 = vmatprep.subr.bf16.mxu0 0
      %869 = vmatpush1.bf16.msra.mxu0 0
      %870 = vmatprep.subr.bf16.mxu0 0
      %871 = vmatpush1.bf16.msra.mxu0 0
      %872 = vmatprep.subr.bf16.mxu0 0
      %873 = vmatpush1.bf16.msra.mxu0 0
      %874 = vmatprep.subr.bf16.mxu0 0
      %875 = vmatpush1.bf16.msra.mxu0 0
      %876 = vmatprep.subr.bf16.mxu0 0
      %877 = vmatpush1.bf16.msra.mxu0 0
      %878 = vmatprep.subr.bf16.mxu0 0
      %879 = vmatpush1.bf16.msra.mxu0 0
      %880 = vmatprep.subr.bf16.mxu0 0
      %881 = vmatpush1.bf16.msra.mxu0 0
      %882 = vmatprep.subr.bf16.mxu0 0
      %883 = vmatpush1.bf16.msra.mxu0 0
      %884 = vmatprep.subr.bf16.mxu0 0
      %885 = vmatpush1.bf16.msra.mxu0 0
      %886 = vmatprep.subr.bf16.mxu0 0
      %887 = vmatpush1.bf16.msra.mxu0 0
      %888 = vmatprep.subr.bf16.mxu0 0
      %889 = vmatpush1.bf16.msra.mxu0 0
      %890 = vmatprep.mubr.bf16.mxu0 0
      %891 = vmatmul.mubr.bf16.gmra.mrb[0].mxu0 %v856
      %v892 = vpop.f32.mrb[0].mxu0
      %v893 = vadd.f32 %v324, %v892
      %v894 = vpop.f32.mrb[0].mxu0
      %v895 = vpop.f32.mrb[0].mxu0
      %v896 = vpop.f32.mrb[0].mxu0
      %897 = vdwg.mxu0
      %v898 = vmul.f32 %v893, 0.5
      %v899 = vtanh.pop %v898
      %v900 = vadd.f32 %v899, 1.0
      %v901 = vmul.f32 %v900, 0.5
      %v902 = vtanh.pop %v893
      %v903 = vmul.f32 %v901, %v766
      %905 = vrot.lane.b32.xlu0 %v902, 64
      %v906 = vpop.permute.xlu0 %905
      %v908 = vmul.f32 %v901, %v906
      %910 = vrot.lane.b32.xlu0 %v908, 32
      %v911 = vpop.permute.xlu0 %910
      %v913 = vadd.f32 %v903, %v911
      %v914 = vtanh.pop %v913
      %916 = vrot.lane.b32.xlu0 %v914, 64
      %v917 = vpop.permute.xlu0 %916
      %v919 = vmul.f32 %v901, %v917
      %s920 = scalar_lea.vmem [#allocation2], 24
      %v921 = vld [vmem:[%s920] sm:$0xff]
      %v922 = vpack.c.bf16 %v844, %v844
      %924 = vrot.lane.b32.xlu0 %v922, 32
      %v925 = vpop.permute.xlu0 %924
      %v927 = vsel %vm463, %v925, 0
      %929 = vmatprep.subr.bf16.mxu0 0
      %930 = vmatpush1.bf16.msra.mxu0 %v459
      %931 = vmatprep.subr.bf16.mxu0 0
      %932 = vmatpush1.bf16.msra.mxu0 %v460
      %933 = vmatprep.subr.bf16.mxu0 0
      %934 = vmatpush1.bf16.msra.mxu0 0
      %935 = vmatprep.subr.bf16.mxu0 0
      %936 = vmatpush1.bf16.msra.mxu0 0
      %937 = vmatprep.subr.bf16.mxu0 0
      %938 = vmatpush1.bf16.msra.mxu0 0
      %939 = vmatprep.subr.bf16.mxu0 0
      %940 = vmatpush1.bf16.msra.mxu0 0
      %941 = vmatprep.subr.bf16.mxu0 0
      %942 = vmatpush1.bf16.msra.mxu0 0
      %943 = vmatprep.subr.bf16.mxu0 0
      %944 = vmatpush1.bf16.msra.mxu0 0
      %945 = vmatprep.subr.bf16.mxu0 0
      %946 = vmatpush1.bf16.msra.mxu0 0
      %947 = vmatprep.subr.bf16.mxu0 0
      %948 = vmatpush1.bf16.msra.mxu0 0
      %949 = vmatprep.subr.bf16.mxu0 0
      %950 = vmatpush1.bf16.msra.mxu0 0
      %951 = vmatprep.subr.bf16.mxu0 0
      %952 = vmatpush1.bf16.msra.mxu0 0
      %953 = vmatprep.subr.bf16.mxu0 0
      %954 = vmatpush1.bf16.msra.mxu0 0
      %955 = vmatprep.subr.bf16.mxu0 0
      %956 = vmatpush1.bf16.msra.mxu0 0
      %957 = vmatprep.subr.bf16.mxu0 0
      %958 = vmatpush1.bf16.msra.mxu0 0
      %959 = vmatprep.subr.bf16.mxu0 0
      %960 = vmatpush1.bf16.msra.mxu0 0
      %961 = vmatprep.mubr.bf16.mxu0 0
      %962 = vmatmul.mubr.bf16.gmra.mrb[0].mxu0 %v927
      %v963 = vpop.f32.mrb[0].mxu0
      %v964 = vadd.f32 0.0, %v963
      %v965 = vpop.f32.mrb[0].mxu0
      %v966 = vpop.f32.mrb[0].mxu0
      %v967 = vpop.f32.mrb[0].mxu0
      %968 = vdwg.mxu0
      %v969 = vadd.f32 %v921, %v964
      %v970 = vmul.f32 %v969, 0.5
      %v971 = vtanh.pop %v970
      %v972 = vadd.f32 %v971, 1.0
      %v973 = vmul.f32 %v972, 0.5
      %v974 = vtanh.pop %v969
      %v975 = vmul.f32 %v973, %v838
      %977 = vrot.lane.b32.xlu0 %v974, 64
      %v978 = vpop.permute.xlu0 %977
      %v980 = vmul.f32 %v973, %v978
      %982 = vrot.lane.b32.xlu0 %v980, 32
      %v983 = vpop.permute.xlu0 %982
      %v985 = vadd.f32 %v975, %v983
      %v986 = vtanh.pop %v985
      %988 = vrot.lane.b32.xlu0 %v986, 64
      %v989 = vpop.permute.xlu0 %988
      %v991 = vmul.f32 %v973, %v989
      %993 = vrot.lane.b32.xlu0 %v991, 32
      %v994 = vpop.permute.xlu0 %993
      %997 = vrot.lane.b32.xlu0 %v919, 64
      %v998 = vpop.permute.xlu0 %997
      %v1000 = vsel %vm463, %v994, %v998
      %v1001 = vpack.c.bf16 %v1000, %v1000
      %v1003 = vsel %vm560, %v1001, 0
      %1005 = vmatprep.subr.bf16.mxu0 0
      %1006 = vmatpush1.bf16.msra.mxu0 %v552
      %1007 = vmatprep.subr.bf16.mxu0 0
      %1008 = vmatpush1.bf16.msra.mxu0 %v553
      %1009 = vmatprep.subr.bf16.mxu0 0
      %1010 = vmatpush1.bf16.msra.mxu0 %v554
      %1011 = vmatprep.subr.bf16.mxu0 0
      %1012 = vmatpush1.bf16.msra.mxu0 %v555
      %1013 = vmatprep.subr.bf16.mxu0 0
      %1014 = vmatpush1.bf16.msra.mxu0 0
      %1015 = vmatprep.subr.bf16.mxu0 0
      %1016 = vmatpush1.bf16.msra.mxu0 0
      %1017 = vmatprep.subr.bf16.mxu0 0
      %1018 = vmatpush1.bf16.msra.mxu0 0
      %1019 = vmatprep.subr.bf16.mxu0 0
      %1020 = vmatpush1.bf16.msra.mxu0 0
      %1021 = vmatprep.subr.bf16.mxu0 0
      %1022 = vmatpush1.bf16.msra.mxu0 0
      %1023 = vmatprep.subr.bf16.mxu0 0
      %1024 = vmatpush1.bf16.msra.mxu0 0
      %1025 = vmatprep.subr.bf16.mxu0 0
      %1026 = vmatpush1.bf16.msra.mxu0 0
      %1027 = vmatprep.subr.bf16.mxu0 0
      %1028 = vmatpush1.bf16.msra.mxu0 0
      %1029 = vmatprep.subr.bf16.mxu0 0
      %1030 = vmatpush1.bf16.msra.mxu0 0
      %1031 = vmatprep.subr.bf16.mxu0 0
      %1032 = vmatpush1.bf16.msra.mxu0 0
      %1033 = vmatprep.subr.bf16.mxu0 0
      %1034 = vmatpush1.bf16.msra.mxu0 0
      %1035 = vmatprep.subr.bf16.mxu0 0
      %1036 = vmatpush1.bf16.msra.mxu0 0
      %1037 = vmatprep.mubr.bf16.mxu0 0
      %1038 = vmatmul.mubr.bf16.gmra.mrb[0].mxu0 %v1003
      %v1039 = vpop.f32.mrb[0].mxu0
      %v1040 = vadd.f32 %v324, %v1039
      %v1041 = vpop.f32.mrb[0].mxu0
      %v1042 = vpop.f32.mrb[0].mxu0
      %v1043 = vpop.f32.mrb[0].mxu0
      %1044 = vdwg.mxu0
      %v1045 = vmul.f32 %v1040, 0.5
      %v1046 = vtanh.pop %v1045
      %v1047 = vadd.f32 %v1046, 1.0
      %v1048 = vmul.f32 %v1047, 0.5
      %v1049 = vtanh.pop %v1040
      %v1050 = vmul.f32 %v1048, %v913
      %1052 = vrot.lane.b32.xlu0 %v1049, 64
      %v1053 = vpop.permute.xlu0 %1052
      %v1055 = vmul.f32 %v1048, %v1053
      %1057 = vrot.lane.b32.xlu0 %v1055, 32
      %v1058 = vpop.permute.xlu0 %1057
      %v1060 = vadd.f32 %v1050, %v1058
      %v1061 = vtanh.pop %v1060
      %1063 = vrot.lane.b32.xlu0 %v1061, 64
      %v1064 = vpop.permute.xlu0 %1063
      %v1066 = vmul.f32 %v1048, %v1064
      %s1067 = scalar_lea.vmem [#allocation2], 32
      %v1068 = vld [vmem:[%s1067] sm:$0xff]
      %v1069 = vpack.c.bf16 %v991, %v991
      %1071 = vrot.lane.b32.xlu0 %v1069, 32
      %v1072 = vpop.permute.xlu0 %1071
      %v1074 = vsel %vm463, %v1072, 0
      %1076 = vmatprep.subr.bf16.mxu0 0
      %1077 = vmatpush1.bf16.msra.mxu0 %v459
      %1078 = vmatprep.subr.bf16.mxu0 0
      %1079 = vmatpush1.bf16.msra.mxu0 %v460
      %1080 = vmatprep.subr.bf16.mxu0 0
      %1081 = vmatpush1.bf16.msra.mxu0 0
      %1082 = vmatprep.subr.bf16.mxu0 0
      %1083 = vmatpush1.bf16.msra.mxu0 0
      %1084 = vmatprep.subr.bf16.mxu0 0
      %1085 = vmatpush1.bf16.msra.mxu0 0
      %1086 = vmatprep.subr.bf16.mxu0 0
      %1087 = vmatpush1.bf16.msra.mxu0 0
      %1088 = vmatprep.subr.bf16.mxu0 0
      %1089 = vmatpush1.bf16.msra.mxu0 0
      %1090 = vmatprep.subr.bf16.mxu0 0
      %1091 = vmatpush1.bf16.msra.mxu0 0
      %1092 = vmatprep.subr.bf16.mxu0 0
      %1093 = vmatpush1.bf16.msra.mxu0 0
      %1094 = vmatprep.subr.bf16.mxu0 0
      %1095 = vmatpush1.bf16.msra.mxu0 0
      %1096 = vmatprep.subr.bf16.mxu0 0
      %1097 = vmatpush1.bf16.msra.mxu0 0
      %1098 = vmatprep.subr.bf16.mxu0 0
      %1099 = vmatpush1.bf16.msra.mxu0 0
      %1100 = vmatprep.subr.bf16.mxu0 0
      %1101 = vmatpush1.bf16.msra.mxu0 0
      %1102 = vmatprep.subr.bf16.mxu0 0
      %1103 = vmatpush1.bf16.msra.mxu0 0
      %1104 = vmatprep.subr.bf16.mxu0 0
      %1105 = vmatpush1.bf16.msra.mxu0 0
      %1106 = vmatprep.subr.bf16.mxu0 0
      %1107 = vmatpush1.bf16.msra.mxu0 0
      %1108 = vmatprep.mubr.bf16.mxu0 0
      %1109 = vmatmul.mubr.bf16.gmra.mrb[0].mxu0 %v1074
      %v1110 = vpop.f32.mrb[0].mxu0
      %v1111 = vadd.f32 0.0, %v1110
      %v1112 = vpop.f32.mrb[0].mxu0
      %v1113 = vpop.f32.mrb[0].mxu0
      %v1114 = vpop.f32.mrb[0].mxu0
      %1115 = vdwg.mxu0
      %v1116 = vadd.f32 %v1068, %v1111
      %v1117 = vmul.f32 %v1116, 0.5
      %v1118 = vtanh.pop %v1117
      %v1119 = vadd.f32 %v1118, 1.0
      %v1120 = vmul.f32 %v1119, 0.5
      %v1121 = vtanh.pop %v1116
      %v1122 = vmul.f32 %v1120, %v985
      %1124 = vrot.lane.b32.xlu0 %v1121, 64
      %v1125 = vpop.permute.xlu0 %1124
      %v1127 = vmul.f32 %v1120, %v1125
      %1129 = vrot.lane.b32.xlu0 %v1127, 32
      %v1130 = vpop.permute.xlu0 %1129
      %v1132 = vadd.f32 %v1122, %v1130
      %v1133 = vtanh.pop %v1132
      %1135 = vrot.lane.b32.xlu0 %v1133, 64
      %v1136 = vpop.permute.xlu0 %1135
      %v1138 = vmul.f32 %v1120, %v1136
      %1140 = vrot.lane.b32.xlu0 %v1138, 32
      %v1141 = vpop.permute.xlu0 %1140
      %1144 = vrot.lane.b32.xlu0 %v1066, 64
      %v1145 = vpop.permute.xlu0 %1144
      %v1147 = vsel %vm463, %v1141, %v1145
      %v1148 = vpack.c.bf16 %v1147, %v1147
      %v1150 = vsel %vm560, %v1148, 0
      %1152 = vmatprep.subr.bf16.mxu0 0
      %1153 = vmatpush1.bf16.msra.mxu0 %v552
      %1154 = vmatprep.subr.bf16.mxu0 0
      %1155 = vmatpush1.bf16.msra.mxu0 %v553
      %1156 = vmatprep.subr.bf16.mxu0 0
      %1157 = vmatpush1.bf16.msra.mxu0 %v554
      %1158 = vmatprep.subr.bf16.mxu0 0
      %1159 = vmatpush1.bf16.msra.mxu0 %v555
      %1160 = vmatprep.subr.bf16.mxu0 0
      %1161 = vmatpush1.bf16.msra.mxu0 0
      %1162 = vmatprep.subr.bf16.mxu0 0
      %1163 = vmatpush1.bf16.msra.mxu0 0
      %1164 = vmatprep.subr.bf16.mxu0 0
      %1165 = vmatpush1.bf16.msra.mxu0 0
      %1166 = vmatprep.subr.bf16.mxu0 0
      %1167 = vmatpush1.bf16.msra.mxu0 0
      %1168 = vmatprep.subr.bf16.mxu0 0
      %1169 = vmatpush1.bf16.msra.mxu0 0
      %1170 = vmatprep.subr.bf16.mxu0 0
      %1171 = vmatpush1.bf16.msra.mxu0 0
      %1172 = vmatprep.subr.bf16.mxu0 0
      %1173 = vmatpush1.bf16.msra.mxu0 0
      %1174 = vmatprep.subr.bf16.mxu0 0
      %1175 = vmatpush1.bf16.msra.mxu0 0
      %1176 = vmatprep.subr.bf16.mxu0 0
      %1177 = vmatpush1.bf16.msra.mxu0 0
      %1178 = vmatprep.subr.bf16.mxu0 0
      %1179 = vmatpush1.bf16.msra.mxu0 0
      %1180 = vmatprep.subr.bf16.mxu0 0
      %1181 = vmatpush1.bf16.msra.mxu0 0
      %1182 = vmatprep.subr.bf16.mxu0 0
      %1183 = vmatpush1.bf16.msra.mxu0 0
      %1184 = vmatprep.mubr.bf16.mxu0 0
      %1185 = vmatmul.mubr.bf16.gmra.mrb[0].mxu0 %v1150
      %v1186 = vpop.f32.mrb[0].mxu0
      %v1187 = vadd.f32 %v324, %v1186
      %v1188 = vpop.f32.mrb[0].mxu0
      %v1189 = vpop.f32.mrb[0].mxu0
      %v1190 = vpop.f32.mrb[0].mxu0
      %1191 = vdwg.mxu0
      %v1192 = vmul.f32 %v1187, 0.5
      %v1193 = vtanh.pop %v1192
      %v1194 = vadd.f32 %v1193, 1.0
      %v1195 = vmul.f32 %v1194, 0.5
      %v1196 = vtanh.pop %v1187
      %v1197 = vmul.f32 %v1195, %v1060
      %1199 = vrot.lane.b32.xlu0 %v1196, 64
      %v1200 = vpop.permute.xlu0 %1199
      %v1202 = vmul.f32 %v1195, %v1200
      %1204 = vrot.lane.b32.xlu0 %v1202, 32
      %v1205 = vpop.permute.xlu0 %1204
      %v1207 = vadd.f32 %v1197, %v1205
      %v1208 = vtanh.pop %v1207
      %1210 = vrot.lane.b32.xlu0 %v1208, 64
      %v1211 = vpop.permute.xlu0 %1210
      %v1213 = vmul.f32 %v1195, %v1211
      %s1214 = scalar_lea.vmem [#allocation2], 40
      %v1215 = vld [vmem:[%s1214] sm:$0xff]
      %v1216 = vpack.c.bf16 %v1138, %v1138
      %1218 = vrot.lane.b32.xlu0 %v1216, 32
      %v1219 = vpop.permute.xlu0 %1218
      %v1221 = vsel %vm463, %v1219, 0
      %1223 = vmatprep.subr.bf16.mxu0 0
      %1224 = vmatpush1.bf16.msra.mxu0 %v459
      %1225 = vmatprep.subr.bf16.mxu0 0
      %1226 = vmatpush1.bf16.msra.mxu0 %v460
      %1227 = vmatprep.subr.bf16.mxu0 0
      %1228 = vmatpush1.bf16.msra.mxu0 0
      %1229 = vmatprep.subr.bf16.mxu0 0
      %1230 = vmatpush1.bf16.msra.mxu0 0
      %1231 = vmatprep.subr.bf16.mxu0 0
      %1232 = vmatpush1.bf16.msra.mxu0 0
      %1233 = vmatprep.subr.bf16.mxu0 0
      %1234 = vmatpush1.bf16.msra.mxu0 0
      %1235 = vmatprep.subr.bf16.mxu0 0
      %1236 = vmatpush1.bf16.msra.mxu0 0
      %1237 = vmatprep.subr.bf16.mxu0 0
      %1238 = vmatpush1.bf16.msra.mxu0 0
      %1239 = vmatprep.subr.bf16.mxu0 0
      %1240 = vmatpush1.bf16.msra.mxu0 0
      %1241 = vmatprep.subr.bf16.mxu0 0
      %1242 = vmatpush1.bf16.msra.mxu0 0
      %1243 = vmatprep.subr.bf16.mxu0 0
      %1244 = vmatpush1.bf16.msra.mxu0 0
      %1245 = vmatprep.subr.bf16.mxu0 0
      %1246 = vmatpush1.bf16.msra.mxu0 0
      %1247 = vmatprep.subr.bf16.mxu0 0
      %1248 = vmatpush1.bf16.msra.mxu0 0
      %1249 = vmatprep.subr.bf16.mxu0 0
      %1250 = vmatpush1.bf16.msra.mxu0 0
      %1251 = vmatprep.subr.bf16.mxu0 0
      %1252 = vmatpush1.bf16.msra.mxu0 0
      %1253 = vmatprep.subr.bf16.mxu0 0
      %1254 = vmatpush1.bf16.msra.mxu0 0
      %1255 = vmatprep.mubr.bf16.mxu0 0
      %1256 = vmatmul.mubr.bf16.gmra.mrb[0].mxu0 %v1221
      %v1257 = vpop.f32.mrb[0].mxu0
      %v1258 = vadd.f32 0.0, %v1257
      %v1259 = vpop.f32.mrb[0].mxu0
      %v1260 = vpop.f32.mrb[0].mxu0
      %v1261 = vpop.f32.mrb[0].mxu0
      %1262 = vdwg.mxu0
      %v1263 = vadd.f32 %v1215, %v1258
      %v1264 = vmul.f32 %v1263, 0.5
      %v1265 = vtanh.pop %v1264
      %v1266 = vadd.f32 %v1265, 1.0
      %v1267 = vmul.f32 %v1266, 0.5
      %v1268 = vtanh.pop %v1263
      %v1269 = vmul.f32 %v1267, %v1132
      %1271 = vrot.lane.b32.xlu0 %v1268, 64
      %v1272 = vpop.permute.xlu0 %1271
      %v1274 = vmul.f32 %v1267, %v1272
      %1276 = vrot.lane.b32.xlu0 %v1274, 32
      %v1277 = vpop.permute.xlu0 %1276
      %v1279 = vadd.f32 %v1269, %v1277
      %v1280 = vtanh.pop %v1279
      %1282 = vrot.lane.b32.xlu0 %v1280, 64
      %v1283 = vpop.permute.xlu0 %1282
      %v1285 = vmul.f32 %v1267, %v1283
      %1287 = vrot.lane.b32.xlu0 %v1285, 32
      %v1288 = vpop.permute.xlu0 %1287
      %1291 = vrot.lane.b32.xlu0 %v1213, 64
      %v1292 = vpop.permute.xlu0 %1291
      %v1294 = vsel %vm463, %v1288, %v1292
      %v1295 = vpack.c.bf16 %v1294, %v1294
      %v1297 = vsel %vm560, %v1295, 0
      %1299 = vmatprep.subr.bf16.mxu0 0
      %1300 = vmatpush1.bf16.msra.mxu0 %v552
      %1301 = vmatprep.subr.bf16.mxu0 0
      %1302 = vmatpush1.bf16.msra.mxu0 %v553
      %1303 = vmatprep.subr.bf16.mxu0 0
      %1304 = vmatpush1.bf16.msra.mxu0 %v554
      %1305 = vmatprep.subr.bf16.mxu0 0
      %1306 = vmatpush1.bf16.msra.mxu0 %v555
      %1307 = vmatprep.subr.bf16.mxu0 0
      %1308 = vmatpush1.bf16.msra.mxu0 0
      %1309 = vmatprep.subr.bf16.mxu0 0
      %1310 = vmatpush1.bf16.msra.mxu0 0
      %1311 = vmatprep.subr.bf16.mxu0 0
      %1312 = vmatpush1.bf16.msra.mxu0 0
      %1313 = vmatprep.subr.bf16.mxu0 0
      %1314 = vmatpush1.bf16.msra.mxu0 0
      %1315 = vmatprep.subr.bf16.mxu0 0
      %1316 = vmatpush1.bf16.msra.mxu0 0
      %1317 = vmatprep.subr.bf16.mxu0 0
      %1318 = vmatpush1.bf16.msra.mxu0 0
      %1319 = vmatprep.subr.bf16.mxu0 0
      %1320 = vmatpush1.bf16.msra.mxu0 0
      %1321 = vmatprep.subr.bf16.mxu0 0
      %1322 = vmatpush1.bf16.msra.mxu0 0
      %1323 = vmatprep.subr.bf16.mxu0 0
      %1324 = vmatpush1.bf16.msra.mxu0 0
      %1325 = vmatprep.subr.bf16.mxu0 0
      %1326 = vmatpush1.bf16.msra.mxu0 0
      %1327 = vmatprep.subr.bf16.mxu0 0
      %1328 = vmatpush1.bf16.msra.mxu0 0
      %1329 = vmatprep.subr.bf16.mxu0 0
      %1330 = vmatpush1.bf16.msra.mxu0 0
      %1331 = vmatprep.mubr.bf16.mxu0 0
      %1332 = vmatmul.mubr.bf16.gmra.mrb[0].mxu0 %v1297
      %v1333 = vpop.f32.mrb[0].mxu0
      %v1334 = vadd.f32 %v324, %v1333
      %v1335 = vpop.f32.mrb[0].mxu0
      %v1336 = vpop.f32.mrb[0].mxu0
      %v1337 = vpop.f32.mrb[0].mxu0
      %1338 = vdwg.mxu0
      %v1339 = vmul.f32 %v1334, 0.5
      %v1340 = vtanh.pop %v1339
      %v1341 = vadd.f32 %v1340, 1.0
      %v1342 = vmul.f32 %v1341, 0.5
      %v1343 = vtanh.pop %v1334
      %v1344 = vmul.f32 %v1342, %v1207
      %1346 = vrot.lane.b32.xlu0 %v1343, 64
      %v1347 = vpop.permute.xlu0 %1346
      %v1349 = vmul.f32 %v1342, %v1347
      %1351 = vrot.lane.b32.xlu0 %v1349, 32
      %v1352 = vpop.permute.xlu0 %1351
      %v1354 = vadd.f32 %v1344, %v1352
      %v1355 = vtanh.pop %v1354
      %1357 = vrot.lane.b32.xlu0 %v1355, 64
      %v1358 = vpop.permute.xlu0 %1357
      %v1360 = vmul.f32 %v1342, %v1358
      %s1361 = scalar_lea.vmem [#allocation2], 48
      %v1362 = vld [vmem:[%s1361] sm:$0xff]
      %v1363 = vpack.c.bf16 %v1285, %v1285
      %1365 = vrot.lane.b32.xlu0 %v1363, 32
      %v1366 = vpop.permute.xlu0 %1365
      %v1368 = vsel %vm463, %v1366, 0
      %1370 = vmatprep.subr.bf16.mxu0 0
      %1371 = vmatpush1.bf16.msra.mxu0 %v459
      %1372 = vmatprep.subr.bf16.mxu0 0
      %1373 = vmatpush1.bf16.msra.mxu0 %v460
      %1374 = vmatprep.subr.bf16.mxu0 0
      %1375 = vmatpush1.bf16.msra.mxu0 0
      %1376 = vmatprep.subr.bf16.mxu0 0
      %1377 = vmatpush1.bf16.msra.mxu0 0
      %1378 = vmatprep.subr.bf16.mxu0 0
      %1379 = vmatpush1.bf16.msra.mxu0 0
      %1380 = vmatprep.subr.bf16.mxu0 0
      %1381 = vmatpush1.bf16.msra.mxu0 0
      %1382 = vmatprep.subr.bf16.mxu0 0
      %1383 = vmatpush1.bf16.msra.mxu0 0
      %1384 = vmatprep.subr.bf16.mxu0 0
      %1385 = vmatpush1.bf16.msra.mxu0 0
      %1386 = vmatprep.subr.bf16.mxu0 0
      %1387 = vmatpush1.bf16.msra.mxu0 0
      %1388 = vmatprep.subr.bf16.mxu0 0
      %1389 = vmatpush1.bf16.msra.mxu0 0
      %1390 = vmatprep.subr.bf16.mxu0 0
      %1391 = vmatpush1.bf16.msra.mxu0 0
      %1392 = vmatprep.subr.bf16.mxu0 0
      %1393 = vmatpush1.bf16.msra.mxu0 0
      %1394 = vmatprep.subr.bf16.mxu0 0
      %1395 = vmatpush1.bf16.msra.mxu0 0
      %1396 = vmatprep.subr.bf16.mxu0 0
      %1397 = vmatpush1.bf16.msra.mxu0 0
      %1398 = vmatprep.subr.bf16.mxu0 0
      %1399 = vmatpush1.bf16.msra.mxu0 0
      %1400 = vmatprep.subr.bf16.mxu0 0
      %1401 = vmatpush1.bf16.msra.mxu0 0
      %1402 = vmatprep.mubr.bf16.mxu0 0
      %1403 = vmatmul.mubr.bf16.gmra.mrb[0].mxu0 %v1368
      %v1404 = vpop.f32.mrb[0].mxu0
      %v1405 = vadd.f32 0.0, %v1404
      %v1406 = vpop.f32.mrb[0].mxu0
      %v1407 = vpop.f32.mrb[0].mxu0
      %v1408 = vpop.f32.mrb[0].mxu0
      %1409 = vdwg.mxu0
      %v1410 = vadd.f32 %v1362, %v1405
      %v1411 = vmul.f32 %v1410, 0.5
      %v1412 = vtanh.pop %v1411
      %v1413 = vadd.f32 %v1412, 1.0
      %v1414 = vmul.f32 %v1413, 0.5
      %v1415 = vtanh.pop %v1410
      %v1416 = vmul.f32 %v1414, %v1279
      %1418 = vrot.lane.b32.xlu0 %v1415, 64
      %v1419 = vpop.permute.xlu0 %1418
      %v1421 = vmul.f32 %v1414, %v1419
      %1423 = vrot.lane.b32.xlu0 %v1421, 32
      %v1424 = vpop.permute.xlu0 %1423
      %v1426 = vadd.f32 %v1416, %v1424
      %v1427 = vtanh.pop %v1426
      %1429 = vrot.lane.b32.xlu0 %v1427, 64
      %v1430 = vpop.permute.xlu0 %1429
      %v1432 = vmul.f32 %v1414, %v1430
      %1434 = vrot.lane.b32.xlu0 %v1432, 32
      %v1435 = vpop.permute.xlu0 %1434
      %1438 = vrot.lane.b32.xlu0 %v1360, 64
      %v1439 = vpop.permute.xlu0 %1438
      %v1441 = vsel %vm463, %v1435, %v1439
      %v1442 = vpack.c.bf16 %v1441, %v1441
      %v1444 = vsel %vm560, %v1442, 0
      %1446 = vmatprep.subr.bf16.mxu0 0
      %1447 = vmatpush1.bf16.msra.mxu0 %v552
      %1448 = vmatprep.subr.bf16.mxu0 0
      %1449 = vmatpush1.bf16.msra.mxu0 %v553
      %1450 = vmatprep.subr.bf16.mxu0 0
      %1451 = vmatpush1.bf16.msra.mxu0 %v554
      %1452 = vmatprep.subr.bf16.mxu0 0
      %1453 = vmatpush1.bf16.msra.mxu0 %v555
      %1454 = vmatprep.subr.bf16.mxu0 0
      %1455 = vmatpush1.bf16.msra.mxu0 0
      %1456 = vmatprep.subr.bf16.mxu0 0
      %1457 = vmatpush1.bf16.msra.mxu0 0
      %1458 = vmatprep.subr.bf16.mxu0 0
      %1459 = vmatpush1.bf16.msra.mxu0 0
      %1460 = vmatprep.subr.bf16.mxu0 0
      %1461 = vmatpush1.bf16.msra.mxu0 0
      %1462 = vmatprep.subr.bf16.mxu0 0
      %1463 = vmatpush1.bf16.msra.mxu0 0
      %1464 = vmatprep.subr.bf16.mxu0 0
      %1465 = vmatpush1.bf16.msra.mxu0 0
      %1466 = vmatprep.subr.bf16.mxu0 0
      %1467 = vmatpush1.bf16.msra.mxu0 0
      %1468 = vmatprep.subr.bf16.mxu0 0
      %1469 = vmatpush1.bf16.msra.mxu0 0
      %1470 = vmatprep.subr.bf16.mxu0 0
      %1471 = vmatpush1.bf16.msra.mxu0 0
      %1472 = vmatprep.subr.bf16.mxu0 0
      %1473 = vmatpush1.bf16.msra.mxu0 0
      %1474 = vmatprep.subr.bf16.mxu0 0
      %1475 = vmatpush1.bf16.msra.mxu0 0
      %1476 = vmatprep.subr.bf16.mxu0 0
      %1477 = vmatpush1.bf16.msra.mxu0 0
      %1478 = vmatprep.mubr.bf16.mxu0 0
      %1479 = vmatmul.mubr.bf16.gmra.mrb[0].mxu0 %v1444
      %v1480 = vpop.f32.mrb[0].mxu0
      %v1481 = vadd.f32 %v324, %v1480
      %v1482 = vpop.f32.mrb[0].mxu0
      %v1483 = vpop.f32.mrb[0].mxu0
      %v1484 = vpop.f32.mrb[0].mxu0
      %1485 = vdwg.mxu0
      %v1486 = vmul.f32 %v1481, 0.5
      %v1487 = vtanh.pop %v1486
      %v1488 = vadd.f32 %v1487, 1.0
      %v1489 = vmul.f32 %v1488, 0.5
      %v1490 = vtanh.pop %v1481
      %v1491 = vmul.f32 %v1489, %v1354
      %1493 = vrot.lane.b32.xlu0 %v1490, 64
      %v1494 = vpop.permute.xlu0 %1493
      %v1496 = vmul.f32 %v1489, %v1494
      %1498 = vrot.lane.b32.xlu0 %v1496, 32
      %v1499 = vpop.permute.xlu0 %1498
      %v1501 = vadd.f32 %v1491, %v1499
      %v1502 = vtanh.pop %v1501
      %1504 = vrot.lane.b32.xlu0 %v1502, 64
      %v1505 = vpop.permute.xlu0 %1504
      %v1507 = vmul.f32 %v1489, %v1505
      %s1508 = scalar_lea.vmem [#allocation2], 56
      %v1509 = vld [vmem:[%s1508] sm:$0xff]
      %v1510 = vpack.c.bf16 %v1432, %v1432
      %1512 = vrot.lane.b32.xlu0 %v1510, 32
      %v1513 = vpop.permute.xlu0 %1512
      %v1515 = vsel %vm463, %v1513, 0
      %1517 = vmatprep.subr.bf16.mxu0 0
      %1518 = vmatpush1.bf16.msra.mxu0 %v459
      %1519 = vmatprep.subr.bf16.mxu0 0
      %1520 = vmatpush1.bf16.msra.mxu0 %v460
      %1521 = vmatprep.subr.bf16.mxu0 0
      %1522 = vmatpush1.bf16.msra.mxu0 0
      %1523 = vmatprep.subr.bf16.mxu0 0
      %1524 = vmatpush1.bf16.msra.mxu0 0
      %1525 = vmatprep.subr.bf16.mxu0 0
      %1526 = vmatpush1.bf16.msra.mxu0 0
      %1527 = vmatprep.subr.bf16.mxu0 0
      %1528 = vmatpush1.bf16.msra.mxu0 0
      %1529 = vmatprep.subr.bf16.mxu0 0
      %1530 = vmatpush1.bf16.msra.mxu0 0
      %1531 = vmatprep.subr.bf16.mxu0 0
      %1532 = vmatpush1.bf16.msra.mxu0 0
      %1533 = vmatprep.subr.bf16.mxu0 0
      %1534 = vmatpush1.bf16.msra.mxu0 0
      %1535 = vmatprep.subr.bf16.mxu0 0
      %1536 = vmatpush1.bf16.msra.mxu0 0
      %1537 = vmatprep.subr.bf16.mxu0 0
      %1538 = vmatpush1.bf16.msra.mxu0 0
      %1539 = vmatprep.subr.bf16.mxu0 0
      %1540 = vmatpush1.bf16.msra.mxu0 0
      %1541 = vmatprep.subr.bf16.mxu0 0
      %1542 = vmatpush1.bf16.msra.mxu0 0
      %1543 = vmatprep.subr.bf16.mxu0 0
      %1544 = vmatpush1.bf16.msra.mxu0 0
      %1545 = vmatprep.subr.bf16.mxu0 0
      %1546 = vmatpush1.bf16.msra.mxu0 0
      %1547 = vmatprep.subr.bf16.mxu0 0
      %1548 = vmatpush1.bf16.msra.mxu0 0
      %1549 = vmatprep.mubr.bf16.mxu0 0
      %1550 = vmatmul.mubr.bf16.gmra.mrb[0].mxu0 %v1515
      %v1551 = vpop.f32.mrb[0].mxu0
      %v1552 = vadd.f32 0.0, %v1551
      %v1553 = vpop.f32.mrb[0].mxu0
      %v1554 = vpop.f32.mrb[0].mxu0
      %v1555 = vpop.f32.mrb[0].mxu0
      %1556 = vdwg.mxu0
      %v1557 = vadd.f32 %v1509, %v1552
      %v1558 = vmul.f32 %v1557, 0.5
      %v1559 = vtanh.pop %v1558
      %v1560 = vadd.f32 %v1559, 1.0
      %v1561 = vmul.f32 %v1560, 0.5
      %v1562 = vtanh.pop %v1557
      %v1563 = vmul.f32 %v1561, %v1426
      %1565 = vrot.lane.b32.xlu0 %v1562, 64
      %v1566 = vpop.permute.xlu0 %1565
      %v1568 = vmul.f32 %v1561, %v1566
      %1570 = vrot.lane.b32.xlu0 %v1568, 32
      %v1571 = vpop.permute.xlu0 %1570
      %v1573 = vadd.f32 %v1563, %v1571
      %v1574 = vtanh.pop %v1573
      %1576 = vrot.lane.b32.xlu0 %v1574, 64
      %v1577 = vpop.permute.xlu0 %1576
      %v1579 = vmul.f32 %v1561, %v1577
      %1581 = vrot.lane.b32.xlu0 %v1579, 32
      %v1582 = vpop.permute.xlu0 %1581
      %1585 = vrot.lane.b32.xlu0 %v1507, 64
      %v1586 = vpop.permute.xlu0 %1585
      %v1588 = vsel %vm463, %v1582, %v1586
      %v1589 = vpack.c.bf16 %v1588, %v1588
      %v1591 = vsel %vm560, %v1589, 0
      %1593 = vmatprep.subr.bf16.mxu0 0
      %1594 = vmatpush1.bf16.msra.mxu0 %v552
      %1595 = vmatprep.subr.bf16.mxu0 0
      %1596 = vmatpush1.bf16.msra.mxu0 %v553
      %1597 = vmatprep.subr.bf16.mxu0 0
      %1598 = vmatpush1.bf16.msra.mxu0 %v554
      %1599 = vmatprep.subr.bf16.mxu0 0
      %1600 = vmatpush1.bf16.msra.mxu0 %v555
      %1601 = vmatprep.subr.bf16.mxu0 0
      %1602 = vmatpush1.bf16.msra.mxu0 0
      %1603 = vmatprep.subr.bf16.mxu0 0
      %1604 = vmatpush1.bf16.msra.mxu0 0
      %1605 = vmatprep.subr.bf16.mxu0 0
      %1606 = vmatpush1.bf16.msra.mxu0 0
      %1607 = vmatprep.subr.bf16.mxu0 0
      %1608 = vmatpush1.bf16.msra.mxu0 0
      %1609 = vmatprep.subr.bf16.mxu0 0
      %1610 = vmatpush1.bf16.msra.mxu0 0
      %1611 = vmatprep.subr.bf16.mxu0 0
      %1612 = vmatpush1.bf16.msra.mxu0 0
      %1613 = vmatprep.subr.bf16.mxu0 0
      %1614 = vmatpush1.bf16.msra.mxu0 0
      %1615 = vmatprep.subr.bf16.mxu0 0
      %1616 = vmatpush1.bf16.msra.mxu0 0
      %1617 = vmatprep.subr.bf16.mxu0 0
      %1618 = vmatpush1.bf16.msra.mxu0 0
      %1619 = vmatprep.subr.bf16.mxu0 0
      %1620 = vmatpush1.bf16.msra.mxu0 0
      %1621 = vmatprep.subr.bf16.mxu0 0
      %1622 = vmatpush1.bf16.msra.mxu0 0
      %1623 = vmatprep.subr.bf16.mxu0 0
      %1624 = vmatpush1.bf16.msra.mxu0 0
      %1625 = vmatprep.mubr.bf16.mxu0 0
      %1626 = vmatmul.mubr.bf16.gmra.mrb[0].mxu0 %v1591
      %v1627 = vpop.f32.mrb[0].mxu0
      %v1628 = vadd.f32 %v324, %v1627
      %v1629 = vpop.f32.mrb[0].mxu0
      %v1630 = vpop.f32.mrb[0].mxu0
      %v1631 = vpop.f32.mrb[0].mxu0
      %1632 = vdwg.mxu0
      %v1633 = vmul.f32 %v1628, 0.5
      %v1634 = vtanh.pop %v1633
      %v1635 = vadd.f32 %v1634, 1.0
      %v1636 = vmul.f32 %v1635, 0.5
      %v1637 = vtanh.pop %v1628
      %v1638 = vmul.f32 %v1636, %v1501
      %1640 = vrot.lane.b32.xlu0 %v1637, 64
      %v1641 = vpop.permute.xlu0 %1640
      %v1643 = vmul.f32 %v1636, %v1641
      %1645 = vrot.lane.b32.xlu0 %v1643, 32
      %v1646 = vpop.permute.xlu0 %1645
      %v1648 = vadd.f32 %v1638, %v1646
      %v1649 = vtanh.pop %v1648
      %1651 = vrot.lane.b32.xlu0 %v1649, 64
      %v1652 = vpop.permute.xlu0 %1651
      %v1654 = vmul.f32 %v1636, %v1652
      %v1655 = vpack.c.bf16 %v1654, %v1654
      %v1656 = vld [vmem:[%s6] sm:$0xf]
      %v1657 = vld [vmem:[%s6 + $0x4] sm:$0xf]
      %v1658 = vld [vmem:[%s6 + $0x8] sm:$0xf]
      %v1659 = vld [vmem:[%s6 + $0xc] sm:$0xf]
      %v1660 = vld [vmem:[%s7] sm:$0x1]
      %v1662 = vlaneseq
      %v1663 = vshrl.u32 %v1662, 7
      %v1664 = vsub.s32 0, %v1663
      %v1665 = vrot.slane %v1660, %v1664
      %1668 = vrot.lane.b32.xlu0 %v1655, 32
      %v1669 = vpop.permute.xlu0 %1668
      %v1674 = vunpack.c.l.b16 %v1656
      %v1675 = vunpack.c.l.b16 %v1657
      %v1676 = vunpack.c.l.b16 %v1658
      %v1677 = vunpack.c.l.b16 %v1659
      %v1678 = vpack.c.b16 %v1675, %v1674
      %v1679 = vpack.c.b16 %v1677, %v1676
      %v1683 = vsel %vm463, %v1669, 0
      %1685 = vmatprep.subr.bf16.mxu0 0
      %1686 = vmatpush1.bf16.msra.mxu0 %v1678
      %1687 = vmatprep.subr.bf16.mxu0 0
      %1688 = vmatpush1.bf16.msra.mxu0 %v1679
      %1689 = vmatprep.subr.bf16.mxu0 0
      %1690 = vmatpush1.bf16.msra.mxu0 0
      %1691 = vmatprep.subr.bf16.mxu0 0
      %1692 = vmatpush1.bf16.msra.mxu0 0
      %1693 = vmatprep.subr.bf16.mxu0 0
      %1694 = vmatpush1.bf16.msra.mxu0 0
      %1695 = vmatprep.subr.bf16.mxu0 0
      %1696 = vmatpush1.bf16.msra.mxu0 0
      %1697 = vmatprep.subr.bf16.mxu0 0
      %1698 = vmatpush1.bf16.msra.mxu0 0
      %1699 = vmatprep.subr.bf16.mxu0 0
      %1700 = vmatpush1.bf16.msra.mxu0 0
      %1701 = vmatprep.subr.bf16.mxu0 0
      %1702 = vmatpush1.bf16.msra.mxu0 0
      %1703 = vmatprep.subr.bf16.mxu0 0
      %1704 = vmatpush1.bf16.msra.mxu0 0
      %1705 = vmatprep.subr.bf16.mxu0 0
      %1706 = vmatpush1.bf16.msra.mxu0 0
      %1707 = vmatprep.subr.bf16.mxu0 0
      %1708 = vmatpush1.bf16.msra.mxu0 0
      %1709 = vmatprep.subr.bf16.mxu0 0
      %1710 = vmatpush1.bf16.msra.mxu0 0
      %1711 = vmatprep.subr.bf16.mxu0 0
      %1712 = vmatpush1.bf16.msra.mxu0 0
      %1713 = vmatprep.subr.bf16.mxu0 0
      %1714 = vmatpush1.bf16.msra.mxu0 0
      %1715 = vmatprep.subr.bf16.mxu0 0
      %1716 = vmatpush1.bf16.msra.mxu0 0
      %1717 = vmatprep.mubr.bf16.mxu0 0
      %1718 = vmatmul.mubr.bf16.gmra.mrb[0].mxu0 %v1683
      %v1719 = vpop.f32.mrb[0].mxu0
      %v1720 = vadd.f32 %v1665, %v1719
      %v1721 = vpop.f32.mrb[0].mxu0
      %v1722 = vpop.f32.mrb[0].mxu0
      %v1723 = vpop.f32.mrb[0].mxu0
      %1724 = vdwg.mxu0
      %vm1725 = vcmask 31744
      %1726 = vst.msk [vmem:[%s303] sm:$0xff] %vm1725, %v1720
      %p1727 = scmp.lt.s32.totalorder %s19, 1
      %s1728 = scalar_select %p1727, %s19, 1
      %s1729 = smul.addr %s1728, 8
      %s1730 = scalar_lea.vmem %s8, %s1729
      // Predicated region
      $region53: #{tpu_custom_call.1} parent=51 // pred_check
        %p1731 = pneg %p210
      $region54: #{tpu_custom_call.1} parent=51 // pred_check_branch
        %1733 = sbr.rel (%p1731) target = $region56
      $region55: #{tpu_custom_call.1} parent=51 // pred_region
        _
      $region56: #{tpu_custom_call.1} parent=51 // pred_fallthru
        _
    $region52: #{tpu_custom_call.1} parent=5 // pred_fallthru
      _
    %p1734 = scmp.le.s32.totalorder 2, %s14
    // Predicated region
    $region57: #{tpu_custom_call.1} parent=5 // pred_check
      %p1735 = pneg %p1734
    $region58: #{tpu_custom_call.1} parent=5 // pred_check_branch
      %1737 = sbr.rel (%p1735) target = $region60
    $region59: #{tpu_custom_call.1} parent=5 // pred_region
      %s1738 = ssub.s32 %s14, 2
      // Predicated region
      $region61: #{tpu_custom_call.1} parent=59 // pred_check
        %p1739 = pneg %p216
      $region62: #{tpu_custom_call.1} parent=59 // pred_check_branch
        %1741 = sbr.rel (%p1739) target = $region64
      $region63: #{tpu_custom_call.1} parent=59 // pred_region
        %p1742 = scmp.lt.s32.totalorder %s20, 1
        %s1743 = scalar_select %p1742, %s20, 1
        %s1744 = smul.addr %s1743, 8
        %s1745 = scalar_lea.vmem %s8, %s1744
      $region64: #{tpu_custom_call.1} parent=59 // pred_fallthru
        _
    $region60: #{tpu_custom_call.1} parent=5 // pred_fallthru
      _
  $region6: #{tpu_custom_call.1} parent=0 // loop_footer
    %s18 = sadd.s32 1, %s14
  $region7: #{tpu_custom_call.1} parent=0 // loop_footer_branch
    %13 = sbr.rel target = $region3
  $region8: #{tpu_custom_call.1} parent=0 // loop_exit
    _

</llo_original>
